<compile_context>
chip_gen: v5e
topology: v5e:2x2
jax: 0.10.0
libtpu: 0.0.40
codegen_flags: <defaults>
</compile_context>

<pallas_src>
import functools

import jax
import jax.numpy as jnp
from jax.experimental import pallas as pl
from jax.experimental.pallas import tpu as pltpu


# -----------------------------------------------------------------------------
# Fused Pallas kernel (whole network in one call)
# -----------------------------------------------------------------------------
def _make_fused_rnn_kernel(seq_len, batch, hidden, num_layers):
    T, B, H = seq_len, batch, hidden
    G4, G8 = 4 * H, 8 * H

    def gate_split(gates):
        # Full-width transcendentals (one EUP pass each over the whole (B,4H)
        # vreg), then cheap static lane slices of the results.
        sig = jax.nn.sigmoid(gates)
        tnh = jnp.tanh(gates)
        return (sig[:, 0 * H:1 * H],      # i
                sig[:, 1 * H:2 * H],      # f
                tnh[:, 2 * H:3 * H],      # g
                sig[:, 3 * H:4 * H])      # o

    def kernel(*refs):
        # ---- unpack refs (layout fixed by the wrapper) ----
        idx = 0
        x_ref = refs[idx]; idx += 1
        layer_refs = []
        for _ in range(num_layers):
            # (W_ih packed (D_in, 8H), W_hh stacked (2H, 4H), bias (1, 8H))
            layer_refs.append((refs[idx], refs[idx + 1], refs[idx + 2]))
            idx += 3
        ow_ref, ob_ref = refs[idx], refs[idx + 1]; idx += 2   # (2H, 9), (1, 9)
        out_ref = refs[idx]; idx += 1                          # (B, 9)
        gx_ref = refs[idx]; idx += 1                           # (T*B, 8H) scratch
        hbuf_ref = refs[idx] if num_layers > 1 else None       # (T*B, 2H) scratch

        layer_in_ref = x_ref
        h_last_f = h_last_b = None
        for layer in range(num_layers):
            wih_ref, whh_ref, b_ref = layer_refs[layer]
            last_layer = layer == num_layers - 1

            # Hoisted input projection for BOTH directions: one MXU matmul,
            # result parked in VMEM; one vreg-aligned row block is read per
            # step so the (T*B, 8H) slab never sits in vregs.
            gx_ref[...] = jnp.dot(layer_in_ref[...], wih_ref[...],
                                  preferred_element_type=jnp.float32) + b_ref[...]

            # Recurrent weights resident, bf16 operands (single-pass MXU).
            whh_f = whh_ref[0:H, :].astype(jnp.bfloat16)          # (H, 4H)
            h_f = jnp.zeros((B, H), jnp.float32)
            c_f = jnp.zeros((B, H), jnp.float32)

            if last_layer:
                # Backward direction of the last layer: r_out[:, -1, H:2H] is
                # that direction's FIRST processed step (t = T-1) starting from
                # h = c = 0 -> a single cell, no recurrent matmul, c = i*g.
                i_g, f_g, g_g, o_g = gate_split(
                    gx_ref[(T - 1) * B:T * B, G4:G8])
                h_last_b = o_g * jnp.tanh(i_g * g_g)

                for s in range(T):                 # forward direction only
                    gates = gx_ref[s * B:(s + 1) * B, 0:G4] + jnp.dot(
                        h_f.astype(jnp.bfloat16), whh_f,
                        preferred_element_type=jnp.float32)
                    i_g, f_g, g_g, o_g = gate_split(gates)
                    c_f = f_g * c_f + i_g * g_g
                    h_f = o_g * jnp.tanh(c_f)
                h_last_f = h_f
            else:
                whh_b = whh_ref[H:2 * H, :].astype(jnp.bfloat16)  # (H, 4H)
                h_b = jnp.zeros((B, H), jnp.float32)
                c_b = jnp.zeros((B, H), jnp.float32)

                # Both directions advanced inside ONE unrolled loop body: the
                # two per-step dependency chains are independent, so the
                # scheduler overlaps them (chain length T, not 2T).
                for s in range(T):
                    # ---- forward direction, time t = s ----
                    gates_f = gx_ref[s * B:(s + 1) * B, 0:G4] + jnp.dot(
                        h_f.astype(jnp.bfloat16), whh_f,
                        preferred_element_type=jnp.float32)
                    i_g, f_g, g_g, o_g = gate_split(gates_f)
                    c_f = f_g * c_f + i_g * g_g
                    h_f = o_g * jnp.tanh(c_f)
                    hbuf_ref[s * B:(s + 1) * B, 0:H] = h_f

                    # ---- backward direction, time t = T-1-s ----
                    tb = T - 1 - s
                    gates_b = gx_ref[tb * B:(tb + 1) * B, G4:G8] + jnp.dot(
                        h_b.astype(jnp.bfloat16), whh_b,
                        preferred_element_type=jnp.float32)
                    i_g, f_g, g_g, o_g = gate_split(gates_b)
                    c_b = f_g * c_b + i_g * g_g
                    h_b = o_g * jnp.tanh(c_b)
                    hbuf_ref[tb * B:(tb + 1) * B, H:2 * H] = h_b

                layer_in_ref = hbuf_ref        # next layer reads [h_f | h_b]

        # Final Linear(2H -> 9) on r_out[:, -1, :] = [h_f(T-1), h_b(T-1)].
        out_ref[...] = (
            jnp.dot(h_last_f, ow_ref[0:H, :],
                    preferred_element_type=jnp.float32)
            + jnp.dot(h_last_b, ow_ref[H:2 * H, :],
                      preferred_element_type=jnp.float32)
            + ob_ref[...])

    return kernel


# -----------------------------------------------------------------------------
# Wrapper
# -----------------------------------------------------------------------------
def rnn_forward(x, params, hidden, biflag):
    """Forward pass of the `RNN` module. x: (B, T, 26) batch_first -> (B, 9)."""
    B, T, D = x.shape
    H = hidden
    num_layers = 2 if biflag else 1
    B_pad = max(8, ((B + 7) // 8) * 8)     # f32 sublane-tile aligned batch

    # Time-major, batch zero-padded to B_pad, flattened to 2-D once in XLA.
    x_tm = jnp.transpose(x, (1, 0, 2)).astype(jnp.float32)       # (T, B, D)
    x_tm = jnp.pad(x_tm, ((0, 0), (0, B_pad - B), (0, 0)))
    x2d = x_tm.reshape(T * B_pad, D)                             # (T*B_pad, D)

    args = [x2d]
    for layer in range(num_layers):
        p = params["lstm"][layer]
        # One packed W_ih^T per layer: columns [fwd i,f,g,o | bwd i,f,g,o].
        wih_pk = jnp.concatenate(
            [jnp.transpose(p["w_ih_f"]), jnp.transpose(p["w_ih_b"])], axis=1)
        # W_hh^T stacked vertically: rows [0:H] = fwd, rows [H:2H] = bwd.
        whh_pk = jnp.concatenate(
            [jnp.transpose(p["w_hh_f"]), jnp.transpose(p["w_hh_b"])], axis=0)
        # Combined biases, same column layout as wih_pk.
        b_pk = jnp.concatenate(
            [p["b_ih_f"] + p["b_hh_f"],
             p["b_ih_b"] + p["b_hh_b"]]).reshape(1, 8 * H)
        args += [wih_pk, whh_pk, b_pk]
    args.append(jnp.transpose(params["out_w"]))                  # (2H, 9)
    args.append(params["out_b"].reshape(1, -1))                  # (1, 9)

    kernel = _make_fused_rnn_kernel(T, B_pad, H, num_layers)
    vmem = pl.BlockSpec(memory_space=pltpu.MemorySpace.VMEM)
    scratch = [pltpu.VMEM((T * B_pad, 8 * H), jnp.float32)]      # gx slab
    if num_layers > 1:
        scratch.append(pltpu.VMEM((T * B_pad, 2 * H), jnp.float32))  # hidden seq

    out_pad = pl.pallas_call(
        kernel,
        out_shape=jax.ShapeDtypeStruct((B_pad, params["out_b"].shape[0]),
                                       jnp.float32),
        in_specs=[vmem] * len(args),
        out_specs=vmem,
        scratch_shapes=scratch,
        compiler_params=pltpu.CompilerParams(
            vmem_limit_bytes=16 * 1024 * 1024),
    )(*args)
    return out_pad[:B]


# -----------------------------------------------------------------------------
# Pure-JAX reference (same math, f32, no Pallas) for correctness checking
# -----------------------------------------------------------------------------
def _lstm_dir_ref(x_tbd, w_ih, w_hh, b_ih, b_hh, hidden, reverse):
    T, B, _ = x_tbd.shape
    H = hidden
    h = jnp.zeros((B, H), jnp.float32)
    c = jnp.zeros((B, H), jnp.float32)
    outs = [None] * T
    order = range(T - 1, -1, -1) if reverse else range(T)
    for t in order:
        g = x_tbd[t] @ w_ih.T + b_ih + h @ w_hh.T + b_hh
        i = jax.nn.sigmoid(g[:, 0 * H:1 * H])
        f = jax.nn.sigmoid(g[:, 1 * H:2 * H])
        gg = jnp.tanh(g[:, 2 * H:3 * H])
        o = jax.nn.sigmoid(g[:, 3 * H:4 * H])
        c = f * c + i * gg
        h = o * jnp.tanh(c)
        outs[t] = h
    return jnp.stack(outs, axis=0)


def rnn_forward_ref(x, params, hidden, biflag):
    B, T, _ = x.shape
    num_layers = 2 if biflag else 1
    inp = jnp.transpose(x, (1, 0, 2))
    for layer in range(num_layers):
        p = params["lstm"][layer]
        hf = _lstm_dir_ref(inp, p["w_ih_f"], p["w_hh_f"], p["b_ih_f"],
                           p["b_hh_f"], hidden, False)
        hb = _lstm_dir_ref(inp, p["w_ih_b"], p["w_hh_b"], p["b_ih_b"],
                           p["b_hh_b"], hidden, True)
        inp = jnp.concatenate([hf, hb], axis=-1)
    last = inp[T - 1]
    return last @ params["out_w"].T + params["out_b"]


# -----------------------------------------------------------------------------
# Deterministic parameter init (mirrors nn.LSTM / nn.Linear shapes)
# -----------------------------------------------------------------------------
def init_params(key, input_size, hidden, biflag):
    num_layers = 2 if biflag else 1
    bound = 1.0 / jnp.sqrt(jnp.float32(hidden))

    def u(k, shape):
        return jax.random.uniform(k, shape, jnp.float32, -bound, bound)

    params = {"lstm": []}
    for layer in range(num_layers):
        d_in = input_size if layer == 0 else 2 * hidden
        key, *ks = jax.random.split(key, 9)
        params["lstm"].append({
            "w_ih_f": u(ks[0], (4 * hidden, d_in)),
            "w_hh_f": u(ks[1], (4 * hidden, hidden)),
            "b_ih_f": u(ks[2], (4 * hidden,)),
            "b_hh_f": u(ks[3], (4 * hidden,)),
            "w_ih_b": u(ks[4], (4 * hidden, d_in)),
            "w_hh_b": u(ks[5], (4 * hidden, hidden)),
            "b_ih_b": u(ks[6], (4 * hidden,)),
            "b_hh_b": u(ks[7], (4 * hidden,)),
        })
    key, k1, k2 = jax.random.split(key, 3)
    lin_bound = 1.0 / jnp.sqrt(jnp.float32(2 * hidden))
    params["out_w"] = jax.random.uniform(k1, (9, 2 * hidden), jnp.float32,
                                         -lin_bound, lin_bound)
    params["out_b"] = jax.random.uniform(k2, (9,), jnp.float32,
                                         -lin_bound, lin_bound)
    return params


# -----------------------------------------------------------------------------
if __name__ == "__main__":
    BATCH = 2
    SEQ = 8
    INPUT = 26      # fixed by the module
    HIDDEN = 32
    BIFLAG = True   # => num_layers = 2, bidirectional

    key = jax.random.PRNGKey(0)
    key, kx, kp = jax.random.split(key, 3)
    x = jax.random.normal(kx, (BATCH, SEQ, INPUT), jnp.float32)
    params = init_params(kp, INPUT, HIDDEN, BIFLAG)

    fwd = jax.jit(functools.partial(rnn_forward, hidden=HIDDEN, biflag=BIFLAG))
    out = jax.block_until_ready(fwd(x, params))

    ref = rnn_forward_ref(x, params, HIDDEN, BIFLAG)
    assert out.shape == (BATCH, 9), out.shape
    # Tolerance loosened vs the all-f32 version: the recurrent matmuls now use
    # bf16 operands (f32 accumulation).
    err = float(jnp.max(jnp.abs(out - ref)))
    assert jnp.allclose(out, ref, atol=3e-2, rtol=3e-2), f"max abs err {err}"

    print("KERNEL_OK")
</pallas_src>

<mosaic_0001>
module attributes {stable_mosaic.version = 11 : i64} {
  func.func @kernel(%arg0: memref<64x26xf32, #tpu.memory_space<vmem>>, %arg1: memref<26x256xf32, #tpu.memory_space<vmem>>, %arg2: memref<64x128xf32, #tpu.memory_space<vmem>>, %arg3: memref<1x256xf32, #tpu.memory_space<vmem>>, %arg4: memref<64x256xf32, #tpu.memory_space<vmem>>, %arg5: memref<64x128xf32, #tpu.memory_space<vmem>>, %arg6: memref<1x256xf32, #tpu.memory_space<vmem>>, %arg7: memref<64x9xf32, #tpu.memory_space<vmem>>, %arg8: memref<1x9xf32, #tpu.memory_space<vmem>>, %arg9: memref<8x9xf32, #tpu.memory_space<vmem>>, %arg10: memref<64x256xf32, #tpu.memory_space<vmem>>, %arg11: memref<64x64xf32, #tpu.memory_space<vmem>>) attributes {dimension_semantics = [], scalar_prefetch = 0 : i64, scratch_operands = 2 : i64, tpu.core_type = #tpu.core_type<tc>} {
    %c0 = arith.constant 0 : index
    %c0_0 = arith.constant 0 : index
    %0 = vector.load %arg0[%c0, %c0_0] : memref<64x26xf32, #tpu.memory_space<vmem>>, vector<64x26xf32>
    %c0_1 = arith.constant 0 : index
    %c0_2 = arith.constant 0 : index
    %1 = vector.load %arg1[%c0_1, %c0_2] : memref<26x256xf32, #tpu.memory_space<vmem>>, vector<26x256xf32>
    %cst = arith.constant dense<0.000000e+00> : vector<64x256xf32>
    %2 = tpu.matmul %0, %1, %cst {dimension_numbers = #tpu.dot_dimension_numbers<[1], [0], [0], [1], [0, 0, 1, 1], [], []>} : vector<64x26xf32>, vector<26x256xf32>, vector<64x256xf32> -> vector<64x256xf32>
    %c0_3 = arith.constant 0 : index
    %c0_4 = arith.constant 0 : index
    %3 = vector.load %arg3[%c0_3, %c0_4] : memref<1x256xf32, #tpu.memory_space<vmem>>, vector<1x256xf32>
    %4 = vector.broadcast %3 : vector<1x256xf32> to vector<64x256xf32>
    %5 = arith.addf %2, %4 : vector<64x256xf32>
    %c0_5 = arith.constant 0 : index
    %c0_6 = arith.constant 0 : index
    %6 = vector.load %arg10[%c0_5, %c0_6] : memref<64x256xf32, #tpu.memory_space<vmem>>, vector<64x256xf32>
    tpu.vector_store %arg10[%c0_5, %c0_6], %5 {strides = array<i32>} : memref<64x256xf32, #tpu.memory_space<vmem>>, vector<64x256xf32>,
    %c0_7 = arith.constant 0 : index
    %c0_8 = arith.constant 0 : index
    %7 = vector.load %arg2[%c0_7, %c0_8] : memref<64x128xf32, #tpu.memory_space<vmem>>, vector<32x128xf32>
    %8 = arith.truncf %7 : vector<32x128xf32> to vector<32x128xbf16>
    %cst_9 = arith.constant 0.000000e+00 : f32
    %9 = vector.broadcast %cst_9 : f32 to vector<8x32xf32>
    %cst_10 = arith.constant 0.000000e+00 : f32
    %10 = vector.broadcast %cst_10 : f32 to vector<8x32xf32>
    %c32 = arith.constant 32 : index
    %c0_11 = arith.constant 0 : index
    %11 = vector.load %arg2[%c32, %c0_11] : memref<64x128xf32, #tpu.memory_space<vmem>>, vector<32x128xf32>
    %12 = arith.truncf %11 : vector<32x128xf32> to vector<32x128xbf16>
    %cst_12 = arith.constant 0.000000e+00 : f32
    %13 = vector.broadcast %cst_12 : f32 to vector<8x32xf32>
    %cst_13 = arith.constant 0.000000e+00 : f32
    %14 = vector.broadcast %cst_13 : f32 to vector<8x32xf32>
    %c0_14 = arith.constant 0 : index
    %c0_15 = arith.constant 0 : index
    %15 = vector.load %arg10[%c0_14, %c0_15] : memref<64x256xf32, #tpu.memory_space<vmem>>, vector<8x128xf32>
    %16 = arith.truncf %9 : vector<8x32xf32> to vector<8x32xbf16>
    %cst_16 = arith.constant dense<0.000000e+00> : vector<8x128xf32>
    %17 = tpu.matmul %16, %8, %cst_16 {dimension_numbers = #tpu.dot_dimension_numbers<[1], [0], [0], [1], [0, 0, 1, 1], [], []>} : vector<8x32xbf16>, vector<32x128xbf16>, vector<8x128xf32> -> vector<8x128xf32>
    %18 = arith.addf %15, %17 : vector<8x128xf32>
    %19 = arith.negf %18 : vector<8x128xf32>
    %20 = math.exp %19 : vector<8x128xf32>
    %cst_17 = arith.constant 1.000000e+00 : f32
    %21 = vector.broadcast %cst_17 : f32 to vector<8x128xf32>
    %22 = arith.addf %21, %20 : vector<8x128xf32>
    %23 = arith.divf %21, %22 : vector<8x128xf32>
    %24 = math.tanh %18 : vector<8x128xf32>
    %25 = vector.extract_strided_slice %23 {offsets = [0, 0], sizes = [8, 32], strides = [1, 1]} : vector<8x128xf32> to vector<8x32xf32>
    %26 = vector.extract_strided_slice %23 {offsets = [0, 32], sizes = [8, 32], strides = [1, 1]} : vector<8x128xf32> to vector<8x32xf32>
    %27 = vector.extract_strided_slice %24 {offsets = [0, 64], sizes = [8, 32], strides = [1, 1]} : vector<8x128xf32> to vector<8x32xf32>
    %28 = vector.extract_strided_slice %23 {offsets = [0, 96], sizes = [8, 32], strides = [1, 1]} : vector<8x128xf32> to vector<8x32xf32>
    %29 = arith.mulf %26, %10 : vector<8x32xf32>
    %30 = arith.mulf %25, %27 : vector<8x32xf32>
    %31 = arith.addf %29, %30 : vector<8x32xf32>
    %32 = math.tanh %31 : vector<8x32xf32>
    %33 = arith.mulf %28, %32 : vector<8x32xf32>
    %c0_18 = arith.constant 0 : index
    %c0_19 = arith.constant 0 : index
    %34 = vector.load %arg11[%c0_18, %c0_19] : memref<64x64xf32, #tpu.memory_space<vmem>>, vector<8x32xf32>
    tpu.vector_store %arg11[%c0_18, %c0_19], %33 {strides = array<i32>} : memref<64x64xf32, #tpu.memory_space<vmem>>, vector<8x32xf32>,
    %c56 = arith.constant 56 : index
    %c128 = arith.constant 128 : index
    %35 = vector.load %arg10[%c56, %c128] : memref<64x256xf32, #tpu.memory_space<vmem>>, vector<8x128xf32>
    %36 = arith.truncf %13 : vector<8x32xf32> to vector<8x32xbf16>
    %cst_20 = arith.constant dense<0.000000e+00> : vector<8x128xf32>
    %37 = tpu.matmul %36, %12, %cst_20 {dimension_numbers = #tpu.dot_dimension_numbers<[1], [0], [0], [1], [0, 0, 1, 1], [], []>} : vector<8x32xbf16>, vector<32x128xbf16>, vector<8x128xf32> -> vector<8x128xf32>
    %38 = arith.addf %35, %37 : vector<8x128xf32>
    %39 = arith.negf %38 : vector<8x128xf32>
    %40 = math.exp %39 : vector<8x128xf32>
    %cst_21 = arith.constant 1.000000e+00 : f32
    %41 = vector.broadcast %cst_21 : f32 to vector<8x128xf32>
    %42 = arith.addf %41, %40 : vector<8x128xf32>
    %43 = arith.divf %41, %42 : vector<8x128xf32>
    %44 = math.tanh %38 : vector<8x128xf32>
    %45 = vector.extract_strided_slice %43 {offsets = [0, 0], sizes = [8, 32], strides = [1, 1]} : vector<8x128xf32> to vector<8x32xf32>
    %46 = vector.extract_strided_slice %43 {offsets = [0, 32], sizes = [8, 32], strides = [1, 1]} : vector<8x128xf32> to vector<8x32xf32>
    %47 = vector.extract_strided_slice %44 {offsets = [0, 64], sizes = [8, 32], strides = [1, 1]} : vector<8x128xf32> to vector<8x32xf32>
    %48 = vector.extract_strided_slice %43 {offsets = [0, 96], sizes = [8, 32], strides = [1, 1]} : vector<8x128xf32> to vector<8x32xf32>
    %49 = arith.mulf %46, %14 : vector<8x32xf32>
    %50 = arith.mulf %45, %47 : vector<8x32xf32>
    %51 = arith.addf %49, %50 : vector<8x32xf32>
    %52 = math.tanh %51 : vector<8x32xf32>
    %53 = arith.mulf %48, %52 : vector<8x32xf32>
    %c56_22 = arith.constant 56 : index
    %c32_23 = arith.constant 32 : index
    %54 = vector.load %arg11[%c56_22, %c32_23] : memref<64x64xf32, #tpu.memory_space<vmem>>, vector<8x32xf32>
    tpu.vector_store %arg11[%c56_22, %c32_23], %53 {strides = array<i32>} : memref<64x64xf32, #tpu.memory_space<vmem>>, vector<8x32xf32>,
    %c8 = arith.constant 8 : index
    %c0_24 = arith.constant 0 : index
    %55 = vector.load %arg10[%c8, %c0_24] : memref<64x256xf32, #tpu.memory_space<vmem>>, vector<8x128xf32>
    %56 = arith.truncf %33 : vector<8x32xf32> to vector<8x32xbf16>
    %cst_25 = arith.constant dense<0.000000e+00> : vector<8x128xf32>
    %57 = tpu.matmul %56, %8, %cst_25 {dimension_numbers = #tpu.dot_dimension_numbers<[1], [0], [0], [1], [0, 0, 1, 1], [], []>} : vector<8x32xbf16>, vector<32x128xbf16>, vector<8x128xf32> -> vector<8x128xf32>
    %58 = arith.addf %55, %57 : vector<8x128xf32>
    %59 = arith.negf %58 : vector<8x128xf32>
    %60 = math.exp %59 : vector<8x128xf32>
    %cst_26 = arith.constant 1.000000e+00 : f32
    %61 = vector.broadcast %cst_26 : f32 to vector<8x128xf32>
    %62 = arith.addf %61, %60 : vector<8x128xf32>
    %63 = arith.divf %61, %62 : vector<8x128xf32>
    %64 = math.tanh %58 : vector<8x128xf32>
    %65 = vector.extract_strided_slice %63 {offsets = [0, 0], sizes = [8, 32], strides = [1, 1]} : vector<8x128xf32> to vector<8x32xf32>
    %66 = vector.extract_strided_slice %63 {offsets = [0, 32], sizes = [8, 32], strides = [1, 1]} : vector<8x128xf32> to vector<8x32xf32>
    %67 = vector.extract_strided_slice %64 {offsets = [0, 64], sizes = [8, 32], strides = [1, 1]} : vector<8x128xf32> to vector<8x32xf32>
    %68 = vector.extract_strided_slice %63 {offsets = [0, 96], sizes = [8, 32], strides = [1, 1]} : vector<8x128xf32> to vector<8x32xf32>
    %69 = arith.mulf %66, %31 : vector<8x32xf32>
    %70 = arith.mulf %65, %67 : vector<8x32xf32>
    %71 = arith.addf %69, %70 : vector<8x32xf32>
    %72 = math.tanh %71 : vector<8x32xf32>
    %73 = arith.mulf %68, %72 : vector<8x32xf32>
    %c8_27 = arith.constant 8 : index
    %c0_28 = arith.constant 0 : index
    %74 = vector.load %arg11[%c8_27, %c0_28] : memref<64x64xf32, #tpu.memory_space<vmem>>, vector<8x32xf32>
    tpu.vector_store %arg11[%c8_27, %c0_28], %73 {strides = array<i32>} : memref<64x64xf32, #tpu.memory_space<vmem>>, vector<8x32xf32>,
    %c48 = arith.constant 48 : index
    %c128_29 = arith.constant 128 : index
    %75 = vector.load %arg10[%c48, %c128_29] : memref<64x256xf32, #tpu.memory_space<vmem>>, vector<8x128xf32>
    %76 = arith.truncf %53 : vector<8x32xf32> to vector<8x32xbf16>
    %cst_30 = arith.constant dense<0.000000e+00> : vector<8x128xf32>
    %77 = tpu.matmul %76, %12, %cst_30 {dimension_numbers = #tpu.dot_dimension_numbers<[1], [0], [0], [1], [0, 0, 1, 1], [], []>} : vector<8x32xbf16>, vector<32x128xbf16>, vector<8x128xf32> -> vector<8x128xf32>
    %78 = arith.addf %75, %77 : vector<8x128xf32>
    %79 = arith.negf %78 : vector<8x128xf32>
    %80 = math.exp %79 : vector<8x128xf32>
    %cst_31 = arith.constant 1.000000e+00 : f32
    %81 = vector.broadcast %cst_31 : f32 to vector<8x128xf32>
    %82 = arith.addf %81, %80 : vector<8x128xf32>
    %83 = arith.divf %81, %82 : vector<8x128xf32>
    %84 = math.tanh %78 : vector<8x128xf32>
    %85 = vector.extract_strided_slice %83 {offsets = [0, 0], sizes = [8, 32], strides = [1, 1]} : vector<8x128xf32> to vector<8x32xf32>
    %86 = vector.extract_strided_slice %83 {offsets = [0, 32], sizes = [8, 32], strides = [1, 1]} : vector<8x128xf32> to vector<8x32xf32>
    %87 = vector.extract_strided_slice %84 {offsets = [0, 64], sizes = [8, 32], strides = [1, 1]} : vector<8x128xf32> to vector<8x32xf32>
    %88 = vector.extract_strided_slice %83 {offsets = [0, 96], sizes = [8, 32], strides = [1, 1]} : vector<8x128xf32> to vector<8x32xf32>
    %89 = arith.mulf %86, %51 : vector<8x32xf32>
    %90 = arith.mulf %85, %87 : vector<8x32xf32>
    %91 = arith.addf %89, %90 : vector<8x32xf32>
    %92 = math.tanh %91 : vector<8x32xf32>
    %93 = arith.mulf %88, %92 : vector<8x32xf32>
    %c48_32 = arith.constant 48 : index
    %c32_33 = arith.constant 32 : index
    %94 = vector.load %arg11[%c48_32, %c32_33] : memref<64x64xf32, #tpu.memory_space<vmem>>, vector<8x32xf32>
    tpu.vector_store %arg11[%c48_32, %c32_33], %93 {strides = array<i32>} : memref<64x64xf32, #tpu.memory_space<vmem>>, vector<8x32xf32>,
    %c16 = arith.constant 16 : index
    %c0_34 = arith.constant 0 : index
    %95 = vector.load %arg10[%c16, %c0_34] : memref<64x256xf32, #tpu.memory_space<vmem>>, vector<8x128xf32>
    %96 = arith.truncf %73 : vector<8x32xf32> to vector<8x32xbf16>
    %cst_35 = arith.constant dense<0.000000e+00> : vector<8x128xf32>
    %97 = tpu.matmul %96, %8, %cst_35 {dimension_numbers = #tpu.dot_dimension_numbers<[1], [0], [0], [1], [0, 0, 1, 1], [], []>} : vector<8x32xbf16>, vector<32x128xbf16>, vector<8x128xf32> -> vector<8x128xf32>
    %98 = arith.addf %95, %97 : vector<8x128xf32>
    %99 = arith.negf %98 : vector<8x128xf32>
    %100 = math.exp %99 : vector<8x128xf32>
    %cst_36 = arith.constant 1.000000e+00 : f32
    %101 = vector.broadcast %cst_36 : f32 to vector<8x128xf32>
    %102 = arith.addf %101, %100 : vector<8x128xf32>
    %103 = arith.divf %101, %102 : vector<8x128xf32>
    %104 = math.tanh %98 : vector<8x128xf32>
    %105 = vector.extract_strided_slice %103 {offsets = [0, 0], sizes = [8, 32], strides = [1, 1]} : vector<8x128xf32> to vector<8x32xf32>
    %106 = vector.extract_strided_slice %103 {offsets = [0, 32], sizes = [8, 32], strides = [1, 1]} : vector<8x128xf32> to vector<8x32xf32>
    %107 = vector.extract_strided_slice %104 {offsets = [0, 64], sizes = [8, 32], strides = [1, 1]} : vector<8x128xf32> to vector<8x32xf32>
    %108 = vector.extract_strided_slice %103 {offsets = [0, 96], sizes = [8, 32], strides = [1, 1]} : vector<8x128xf32> to vector<8x32xf32>
    %109 = arith.mulf %106, %71 : vector<8x32xf32>
    %110 = arith.mulf %105, %107 : vector<8x32xf32>
    %111 = arith.addf %109, %110 : vector<8x32xf32>
    %112 = math.tanh %111 : vector<8x32xf32>
    %113 = arith.mulf %108, %112 : vector<8x32xf32>
    %c16_37 = arith.constant 16 : index
    %c0_38 = arith.constant 0 : index
    %114 = vector.load %arg11[%c16_37, %c0_38] : memref<64x64xf32, #tpu.memory_space<vmem>>, vector<8x32xf32>
    tpu.vector_store %arg11[%c16_37, %c0_38], %113 {strides = array<i32>} : memref<64x64xf32, #tpu.memory_space<vmem>>, vector<8x32xf32>,
    %c40 = arith.constant 40 : index
    %c128_39 = arith.constant 128 : index
    %115 = vector.load %arg10[%c40, %c128_39] : memref<64x256xf32, #tpu.memory_space<vmem>>, vector<8x128xf32>
    %116 = arith.truncf %93 : vector<8x32xf32> to vector<8x32xbf16>
    %cst_40 = arith.constant dense<0.000000e+00> : vector<8x128xf32>
    %117 = tpu.matmul %116, %12, %cst_40 {dimension_numbers = #tpu.dot_dimension_numbers<[1], [0], [0], [1], [0, 0, 1, 1], [], []>} : vector<8x32xbf16>, vector<32x128xbf16>, vector<8x128xf32> -> vector<8x128xf32>
    %118 = arith.addf %115, %117 : vector<8x128xf32>
    %119 = arith.negf %118 : vector<8x128xf32>
    %120 = math.exp %119 : vector<8x128xf32>
    %cst_41 = arith.constant 1.000000e+00 : f32
    %121 = vector.broadcast %cst_41 : f32 to vector<8x128xf32>
    %122 = arith.addf %121, %120 : vector<8x128xf32>
    %123 = arith.divf %121, %122 : vector<8x128xf32>
    %124 = math.tanh %118 : vector<8x128xf32>
    %125 = vector.extract_strided_slice %123 {offsets = [0, 0], sizes = [8, 32], strides = [1, 1]} : vector<8x128xf32> to vector<8x32xf32>
    %126 = vector.extract_strided_slice %123 {offsets = [0, 32], sizes = [8, 32], strides = [1, 1]} : vector<8x128xf32> to vector<8x32xf32>
    %127 = vector.extract_strided_slice %124 {offsets = [0, 64], sizes = [8, 32], strides = [1, 1]} : vector<8x128xf32> to vector<8x32xf32>
    %128 = vector.extract_strided_slice %123 {offsets = [0, 96], sizes = [8, 32], strides = [1, 1]} : vector<8x128xf32> to vector<8x32xf32>
    %129 = arith.mulf %126, %91 : vector<8x32xf32>
    %130 = arith.mulf %125, %127 : vector<8x32xf32>
    %131 = arith.addf %129, %130 : vector<8x32xf32>
    %132 = math.tanh %131 : vector<8x32xf32>
    %133 = arith.mulf %128, %132 : vector<8x32xf32>
    %c40_42 = arith.constant 40 : index
    %c32_43 = arith.constant 32 : index
    %134 = vector.load %arg11[%c40_42, %c32_43] : memref<64x64xf32, #tpu.memory_space<vmem>>, vector<8x32xf32>
    tpu.vector_store %arg11[%c40_42, %c32_43], %133 {strides = array<i32>} : memref<64x64xf32, #tpu.memory_space<vmem>>, vector<8x32xf32>,
    %c24 = arith.constant 24 : index
    %c0_44 = arith.constant 0 : index
    %135 = vector.load %arg10[%c24, %c0_44] : memref<64x256xf32, #tpu.memory_space<vmem>>, vector<8x128xf32>
    %136 = arith.truncf %113 : vector<8x32xf32> to vector<8x32xbf16>
    %cst_45 = arith.constant dense<0.000000e+00> : vector<8x128xf32>
    %137 = tpu.matmul %136, %8, %cst_45 {dimension_numbers = #tpu.dot_dimension_numbers<[1], [0], [0], [1], [0, 0, 1, 1], [], []>} : vector<8x32xbf16>, vector<32x128xbf16>, vector<8x128xf32> -> vector<8x128xf32>
    %138 = arith.addf %135, %137 : vector<8x128xf32>
    %139 = arith.negf %138 : vector<8x128xf32>
    %140 = math.exp %139 : vector<8x128xf32>
    %cst_46 = arith.constant 1.000000e+00 : f32
    %141 = vector.broadcast %cst_46 : f32 to vector<8x128xf32>
    %142 = arith.addf %141, %140 : vector<8x128xf32>
    %143 = arith.divf %141, %142 : vector<8x128xf32>
    %144 = math.tanh %138 : vector<8x128xf32>
    %145 = vector.extract_strided_slice %143 {offsets = [0, 0], sizes = [8, 32], strides = [1, 1]} : vector<8x128xf32> to vector<8x32xf32>
    %146 = vector.extract_strided_slice %143 {offsets = [0, 32], sizes = [8, 32], strides = [1, 1]} : vector<8x128xf32> to vector<8x32xf32>
    %147 = vector.extract_strided_slice %144 {offsets = [0, 64], sizes = [8, 32], strides = [1, 1]} : vector<8x128xf32> to vector<8x32xf32>
    %148 = vector.extract_strided_slice %143 {offsets = [0, 96], sizes = [8, 32], strides = [1, 1]} : vector<8x128xf32> to vector<8x32xf32>
    %149 = arith.mulf %146, %111 : vector<8x32xf32>
    %150 = arith.mulf %145, %147 : vector<8x32xf32>
    %151 = arith.addf %149, %150 : vector<8x32xf32>
    %152 = math.tanh %151 : vector<8x32xf32>
    %153 = arith.mulf %148, %152 : vector<8x32xf32>
    %c24_47 = arith.constant 24 : index
    %c0_48 = arith.constant 0 : index
    %154 = vector.load %arg11[%c24_47, %c0_48] : memref<64x64xf32, #tpu.memory_space<vmem>>, vector<8x32xf32>
    tpu.vector_store %arg11[%c24_47, %c0_48], %153 {strides = array<i32>} : memref<64x64xf32, #tpu.memory_space<vmem>>, vector<8x32xf32>,
    %c32_49 = arith.constant 32 : index
    %c128_50 = arith.constant 128 : index
    %155 = vector.load %arg10[%c32_49, %c128_50] : memref<64x256xf32, #tpu.memory_space<vmem>>, vector<8x128xf32>
    %156 = arith.truncf %133 : vector<8x32xf32> to vector<8x32xbf16>
    %cst_51 = arith.constant dense<0.000000e+00> : vector<8x128xf32>
    %157 = tpu.matmul %156, %12, %cst_51 {dimension_numbers = #tpu.dot_dimension_numbers<[1], [0], [0], [1], [0, 0, 1, 1], [], []>} : vector<8x32xbf16>, vector<32x128xbf16>, vector<8x128xf32> -> vector<8x128xf32>
    %158 = arith.addf %155, %157 : vector<8x128xf32>
    %159 = arith.negf %158 : vector<8x128xf32>
    %160 = math.exp %159 : vector<8x128xf32>
    %cst_52 = arith.constant 1.000000e+00 : f32
    %161 = vector.broadcast %cst_52 : f32 to vector<8x128xf32>
    %162 = arith.addf %161, %160 : vector<8x128xf32>
    %163 = arith.divf %161, %162 : vector<8x128xf32>
    %164 = math.tanh %158 : vector<8x128xf32>
    %165 = vector.extract_strided_slice %163 {offsets = [0, 0], sizes = [8, 32], strides = [1, 1]} : vector<8x128xf32> to vector<8x32xf32>
    %166 = vector.extract_strided_slice %163 {offsets = [0, 32], sizes = [8, 32], strides = [1, 1]} : vector<8x128xf32> to vector<8x32xf32>
    %167 = vector.extract_strided_slice %164 {offsets = [0, 64], sizes = [8, 32], strides = [1, 1]} : vector<8x128xf32> to vector<8x32xf32>
    %168 = vector.extract_strided_slice %163 {offsets = [0, 96], sizes = [8, 32], strides = [1, 1]} : vector<8x128xf32> to vector<8x32xf32>
    %169 = arith.mulf %166, %131 : vector<8x32xf32>
    %170 = arith.mulf %165, %167 : vector<8x32xf32>
    %171 = arith.addf %169, %170 : vector<8x32xf32>
    %172 = math.tanh %171 : vector<8x32xf32>
    %173 = arith.mulf %168, %172 : vector<8x32xf32>
    %c32_53 = arith.constant 32 : index
    %c32_54 = arith.constant 32 : index
    %174 = vector.load %arg11[%c32_53, %c32_54] : memref<64x64xf32, #tpu.memory_space<vmem>>, vector<8x32xf32>
    tpu.vector_store %arg11[%c32_53, %c32_54], %173 {strides = array<i32>} : memref<64x64xf32, #tpu.memory_space<vmem>>, vector<8x32xf32>,
    %c32_55 = arith.constant 32 : index
    %c0_56 = arith.constant 0 : index
    %175 = vector.load %arg10[%c32_55, %c0_56] : memref<64x256xf32, #tpu.memory_space<vmem>>, vector<8x128xf32>
    %176 = arith.truncf %153 : vector<8x32xf32> to vector<8x32xbf16>
    %cst_57 = arith.constant dense<0.000000e+00> : vector<8x128xf32>
    %177 = tpu.matmul %176, %8, %cst_57 {dimension_numbers = #tpu.dot_dimension_numbers<[1], [0], [0], [1], [0, 0, 1, 1], [], []>} : vector<8x32xbf16>, vector<32x128xbf16>, vector<8x128xf32> -> vector<8x128xf32>
    %178 = arith.addf %175, %177 : vector<8x128xf32>
    %179 = arith.negf %178 : vector<8x128xf32>
    %180 = math.exp %179 : vector<8x128xf32>
    %cst_58 = arith.constant 1.000000e+00 : f32
    %181 = vector.broadcast %cst_58 : f32 to vector<8x128xf32>
    %182 = arith.addf %181, %180 : vector<8x128xf32>
    %183 = arith.divf %181, %182 : vector<8x128xf32>
    %184 = math.tanh %178 : vector<8x128xf32>
    %185 = vector.extract_strided_slice %183 {offsets = [0, 0], sizes = [8, 32], strides = [1, 1]} : vector<8x128xf32> to vector<8x32xf32>
    %186 = vector.extract_strided_slice %183 {offsets = [0, 32], sizes = [8, 32], strides = [1, 1]} : vector<8x128xf32> to vector<8x32xf32>
    %187 = vector.extract_strided_slice %184 {offsets = [0, 64], sizes = [8, 32], strides = [1, 1]} : vector<8x128xf32> to vector<8x32xf32>
    %188 = vector.extract_strided_slice %183 {offsets = [0, 96], sizes = [8, 32], strides = [1, 1]} : vector<8x128xf32> to vector<8x32xf32>
    %189 = arith.mulf %186, %151 : vector<8x32xf32>
    %190 = arith.mulf %185, %187 : vector<8x32xf32>
    %191 = arith.addf %189, %190 : vector<8x32xf32>
    %192 = math.tanh %191 : vector<8x32xf32>
    %193 = arith.mulf %188, %192 : vector<8x32xf32>
    %c32_59 = arith.constant 32 : index
    %c0_60 = arith.constant 0 : index
    %194 = vector.load %arg11[%c32_59, %c0_60] : memref<64x64xf32, #tpu.memory_space<vmem>>, vector<8x32xf32>
    tpu.vector_store %arg11[%c32_59, %c0_60], %193 {strides = array<i32>} : memref<64x64xf32, #tpu.memory_space<vmem>>, vector<8x32xf32>,
    %c24_61 = arith.constant 24 : index
    %c128_62 = arith.constant 128 : index
    %195 = vector.load %arg10[%c24_61, %c128_62] : memref<64x256xf32, #tpu.memory_space<vmem>>, vector<8x128xf32>
    %196 = arith.truncf %173 : vector<8x32xf32> to vector<8x32xbf16>
    %cst_63 = arith.constant dense<0.000000e+00> : vector<8x128xf32>
    %197 = tpu.matmul %196, %12, %cst_63 {dimension_numbers = #tpu.dot_dimension_numbers<[1], [0], [0], [1], [0, 0, 1, 1], [], []>} : vector<8x32xbf16>, vector<32x128xbf16>, vector<8x128xf32> -> vector<8x128xf32>
    %198 = arith.addf %195, %197 : vector<8x128xf32>
    %199 = arith.negf %198 : vector<8x128xf32>
    %200 = math.exp %199 : vector<8x128xf32>
    %cst_64 = arith.constant 1.000000e+00 : f32
    %201 = vector.broadcast %cst_64 : f32 to vector<8x128xf32>
    %202 = arith.addf %201, %200 : vector<8x128xf32>
    %203 = arith.divf %201, %202 : vector<8x128xf32>
    %204 = math.tanh %198 : vector<8x128xf32>
    %205 = vector.extract_strided_slice %203 {offsets = [0, 0], sizes = [8, 32], strides = [1, 1]} : vector<8x128xf32> to vector<8x32xf32>
    %206 = vector.extract_strided_slice %203 {offsets = [0, 32], sizes = [8, 32], strides = [1, 1]} : vector<8x128xf32> to vector<8x32xf32>
    %207 = vector.extract_strided_slice %204 {offsets = [0, 64], sizes = [8, 32], strides = [1, 1]} : vector<8x128xf32> to vector<8x32xf32>
    %208 = vector.extract_strided_slice %203 {offsets = [0, 96], sizes = [8, 32], strides = [1, 1]} : vector<8x128xf32> to vector<8x32xf32>
    %209 = arith.mulf %206, %171 : vector<8x32xf32>
    %210 = arith.mulf %205, %207 : vector<8x32xf32>
    %211 = arith.addf %209, %210 : vector<8x32xf32>
    %212 = math.tanh %211 : vector<8x32xf32>
    %213 = arith.mulf %208, %212 : vector<8x32xf32>
    %c24_65 = arith.constant 24 : index
    %c32_66 = arith.constant 32 : index
    %214 = vector.load %arg11[%c24_65, %c32_66] : memref<64x64xf32, #tpu.memory_space<vmem>>, vector<8x32xf32>
    tpu.vector_store %arg11[%c24_65, %c32_66], %213 {strides = array<i32>} : memref<64x64xf32, #tpu.memory_space<vmem>>, vector<8x32xf32>,
    %c40_67 = arith.constant 40 : index
    %c0_68 = arith.constant 0 : index
    %215 = vector.load %arg10[%c40_67, %c0_68] : memref<64x256xf32, #tpu.memory_space<vmem>>, vector<8x128xf32>
    %216 = arith.truncf %193 : vector<8x32xf32> to vector<8x32xbf16>
    %cst_69 = arith.constant dense<0.000000e+00> : vector<8x128xf32>
    %217 = tpu.matmul %216, %8, %cst_69 {dimension_numbers = #tpu.dot_dimension_numbers<[1], [0], [0], [1], [0, 0, 1, 1], [], []>} : vector<8x32xbf16>, vector<32x128xbf16>, vector<8x128xf32> -> vector<8x128xf32>
    %218 = arith.addf %215, %217 : vector<8x128xf32>
    %219 = arith.negf %218 : vector<8x128xf32>
    %220 = math.exp %219 : vector<8x128xf32>
    %cst_70 = arith.constant 1.000000e+00 : f32
    %221 = vector.broadcast %cst_70 : f32 to vector<8x128xf32>
    %222 = arith.addf %221, %220 : vector<8x128xf32>
    %223 = arith.divf %221, %222 : vector<8x128xf32>
    %224 = math.tanh %218 : vector<8x128xf32>
    %225 = vector.extract_strided_slice %223 {offsets = [0, 0], sizes = [8, 32], strides = [1, 1]} : vector<8x128xf32> to vector<8x32xf32>
    %226 = vector.extract_strided_slice %223 {offsets = [0, 32], sizes = [8, 32], strides = [1, 1]} : vector<8x128xf32> to vector<8x32xf32>
    %227 = vector.extract_strided_slice %224 {offsets = [0, 64], sizes = [8, 32], strides = [1, 1]} : vector<8x128xf32> to vector<8x32xf32>
    %228 = vector.extract_strided_slice %223 {offsets = [0, 96], sizes = [8, 32], strides = [1, 1]} : vector<8x128xf32> to vector<8x32xf32>
    %229 = arith.mulf %226, %191 : vector<8x32xf32>
    %230 = arith.mulf %225, %227 : vector<8x32xf32>
    %231 = arith.addf %229, %230 : vector<8x32xf32>
    %232 = math.tanh %231 : vector<8x32xf32>
    %233 = arith.mulf %228, %232 : vector<8x32xf32>
    %c40_71 = arith.constant 40 : index
    %c0_72 = arith.constant 0 : index
    %234 = vector.load %arg11[%c40_71, %c0_72] : memref<64x64xf32, #tpu.memory_space<vmem>>, vector<8x32xf32>
    tpu.vector_store %arg11[%c40_71, %c0_72], %233 {strides = array<i32>} : memref<64x64xf32, #tpu.memory_space<vmem>>, vector<8x32xf32>,
    %c16_73 = arith.constant 16 : index
    %c128_74 = arith.constant 128 : index
    %235 = vector.load %arg10[%c16_73, %c128_74] : memref<64x256xf32, #tpu.memory_space<vmem>>, vector<8x128xf32>
    %236 = arith.truncf %213 : vector<8x32xf32> to vector<8x32xbf16>
    %cst_75 = arith.constant dense<0.000000e+00> : vector<8x128xf32>
    %237 = tpu.matmul %236, %12, %cst_75 {dimension_numbers = #tpu.dot_dimension_numbers<[1], [0], [0], [1], [0, 0, 1, 1], [], []>} : vector<8x32xbf16>, vector<32x128xbf16>, vector<8x128xf32> -> vector<8x128xf32>
    %238 = arith.addf %235, %237 : vector<8x128xf32>
    %239 = arith.negf %238 : vector<8x128xf32>
    %240 = math.exp %239 : vector<8x128xf32>
    %cst_76 = arith.constant 1.000000e+00 : f32
    %241 = vector.broadcast %cst_76 : f32 to vector<8x128xf32>
    %242 = arith.addf %241, %240 : vector<8x128xf32>
    %243 = arith.divf %241, %242 : vector<8x128xf32>
    %244 = math.tanh %238 : vector<8x128xf32>
    %245 = vector.extract_strided_slice %243 {offsets = [0, 0], sizes = [8, 32], strides = [1, 1]} : vector<8x128xf32> to vector<8x32xf32>
    %246 = vector.extract_strided_slice %243 {offsets = [0, 32], sizes = [8, 32], strides = [1, 1]} : vector<8x128xf32> to vector<8x32xf32>
    %247 = vector.extract_strided_slice %244 {offsets = [0, 64], sizes = [8, 32], strides = [1, 1]} : vector<8x128xf32> to vector<8x32xf32>
    %248 = vector.extract_strided_slice %243 {offsets = [0, 96], sizes = [8, 32], strides = [1, 1]} : vector<8x128xf32> to vector<8x32xf32>
    %249 = arith.mulf %246, %211 : vector<8x32xf32>
    %250 = arith.mulf %245, %247 : vector<8x32xf32>
    %251 = arith.addf %249, %250 : vector<8x32xf32>
    %252 = math.tanh %251 : vector<8x32xf32>
    %253 = arith.mulf %248, %252 : vector<8x32xf32>
    %c16_77 = arith.constant 16 : index
    %c32_78 = arith.constant 32 : index
    %254 = vector.load %arg11[%c16_77, %c32_78] : memref<64x64xf32, #tpu.memory_space<vmem>>, vector<8x32xf32>
    tpu.vector_store %arg11[%c16_77, %c32_78], %253 {strides = array<i32>} : memref<64x64xf32, #tpu.memory_space<vmem>>, vector<8x32xf32>,
    %c48_79 = arith.constant 48 : index
    %c0_80 = arith.constant 0 : index
    %255 = vector.load %arg10[%c48_79, %c0_80] : memref<64x256xf32, #tpu.memory_space<vmem>>, vector<8x128xf32>
    %256 = arith.truncf %233 : vector<8x32xf32> to vector<8x32xbf16>
    %cst_81 = arith.constant dense<0.000000e+00> : vector<8x128xf32>
    %257 = tpu.matmul %256, %8, %cst_81 {dimension_numbers = #tpu.dot_dimension_numbers<[1], [0], [0], [1], [0, 0, 1, 1], [], []>} : vector<8x32xbf16>, vector<32x128xbf16>, vector<8x128xf32> -> vector<8x128xf32>
    %258 = arith.addf %255, %257 : vector<8x128xf32>
    %259 = arith.negf %258 : vector<8x128xf32>
    %260 = math.exp %259 : vector<8x128xf32>
    %cst_82 = arith.constant 1.000000e+00 : f32
    %261 = vector.broadcast %cst_82 : f32 to vector<8x128xf32>
    %262 = arith.addf %261, %260 : vector<8x128xf32>
    %263 = arith.divf %261, %262 : vector<8x128xf32>
    %264 = math.tanh %258 : vector<8x128xf32>
    %265 = vector.extract_strided_slice %263 {offsets = [0, 0], sizes = [8, 32], strides = [1, 1]} : vector<8x128xf32> to vector<8x32xf32>
    %266 = vector.extract_strided_slice %263 {offsets = [0, 32], sizes = [8, 32], strides = [1, 1]} : vector<8x128xf32> to vector<8x32xf32>
    %267 = vector.extract_strided_slice %264 {offsets = [0, 64], sizes = [8, 32], strides = [1, 1]} : vector<8x128xf32> to vector<8x32xf32>
    %268 = vector.extract_strided_slice %263 {offsets = [0, 96], sizes = [8, 32], strides = [1, 1]} : vector<8x128xf32> to vector<8x32xf32>
    %269 = arith.mulf %266, %231 : vector<8x32xf32>
    %270 = arith.mulf %265, %267 : vector<8x32xf32>
    %271 = arith.addf %269, %270 : vector<8x32xf32>
    %272 = math.tanh %271 : vector<8x32xf32>
    %273 = arith.mulf %268, %272 : vector<8x32xf32>
    %c48_83 = arith.constant 48 : index
    %c0_84 = arith.constant 0 : index
    %274 = vector.load %arg11[%c48_83, %c0_84] : memref<64x64xf32, #tpu.memory_space<vmem>>, vector<8x32xf32>
    tpu.vector_store %arg11[%c48_83, %c0_84], %273 {strides = array<i32>} : memref<64x64xf32, #tpu.memory_space<vmem>>, vector<8x32xf32>,
    %c8_85 = arith.constant 8 : index
    %c128_86 = arith.constant 128 : index
    %275 = vector.load %arg10[%c8_85, %c128_86] : memref<64x256xf32, #tpu.memory_space<vmem>>, vector<8x128xf32>
    %276 = arith.truncf %253 : vector<8x32xf32> to vector<8x32xbf16>
    %cst_87 = arith.constant dense<0.000000e+00> : vector<8x128xf32>
    %277 = tpu.matmul %276, %12, %cst_87 {dimension_numbers = #tpu.dot_dimension_numbers<[1], [0], [0], [1], [0, 0, 1, 1], [], []>} : vector<8x32xbf16>, vector<32x128xbf16>, vector<8x128xf32> -> vector<8x128xf32>
    %278 = arith.addf %275, %277 : vector<8x128xf32>
    %279 = arith.negf %278 : vector<8x128xf32>
    %280 = math.exp %279 : vector<8x128xf32>
    %cst_88 = arith.constant 1.000000e+00 : f32
    %281 = vector.broadcast %cst_88 : f32 to vector<8x128xf32>
    %282 = arith.addf %281, %280 : vector<8x128xf32>
    %283 = arith.divf %281, %282 : vector<8x128xf32>
    %284 = math.tanh %278 : vector<8x128xf32>
    %285 = vector.extract_strided_slice %283 {offsets = [0, 0], sizes = [8, 32], strides = [1, 1]} : vector<8x128xf32> to vector<8x32xf32>
    %286 = vector.extract_strided_slice %283 {offsets = [0, 32], sizes = [8, 32], strides = [1, 1]} : vector<8x128xf32> to vector<8x32xf32>
    %287 = vector.extract_strided_slice %284 {offsets = [0, 64], sizes = [8, 32], strides = [1, 1]} : vector<8x128xf32> to vector<8x32xf32>
    %288 = vector.extract_strided_slice %283 {offsets = [0, 96], sizes = [8, 32], strides = [1, 1]} : vector<8x128xf32> to vector<8x32xf32>
    %289 = arith.mulf %286, %251 : vector<8x32xf32>
    %290 = arith.mulf %285, %287 : vector<8x32xf32>
    %291 = arith.addf %289, %290 : vector<8x32xf32>
    %292 = math.tanh %291 : vector<8x32xf32>
    %293 = arith.mulf %288, %292 : vector<8x32xf32>
    %c8_89 = arith.constant 8 : index
    %c32_90 = arith.constant 32 : index
    %294 = vector.load %arg11[%c8_89, %c32_90] : memref<64x64xf32, #tpu.memory_space<vmem>>, vector<8x32xf32>
    tpu.vector_store %arg11[%c8_89, %c32_90], %293 {strides = array<i32>} : memref<64x64xf32, #tpu.memory_space<vmem>>, vector<8x32xf32>,
    %c56_91 = arith.constant 56 : index
    %c0_92 = arith.constant 0 : index
    %295 = vector.load %arg10[%c56_91, %c0_92] : memref<64x256xf32, #tpu.memory_space<vmem>>, vector<8x128xf32>
    %296 = arith.truncf %273 : vector<8x32xf32> to vector<8x32xbf16>
    %cst_93 = arith.constant dense<0.000000e+00> : vector<8x128xf32>
    %297 = tpu.matmul %296, %8, %cst_93 {dimension_numbers = #tpu.dot_dimension_numbers<[1], [0], [0], [1], [0, 0, 1, 1], [], []>} : vector<8x32xbf16>, vector<32x128xbf16>, vector<8x128xf32> -> vector<8x128xf32>
    %298 = arith.addf %295, %297 : vector<8x128xf32>
    %299 = arith.negf %298 : vector<8x128xf32>
    %300 = math.exp %299 : vector<8x128xf32>
    %cst_94 = arith.constant 1.000000e+00 : f32
    %301 = vector.broadcast %cst_94 : f32 to vector<8x128xf32>
    %302 = arith.addf %301, %300 : vector<8x128xf32>
    %303 = arith.divf %301, %302 : vector<8x128xf32>
    %304 = math.tanh %298 : vector<8x128xf32>
    %305 = vector.extract_strided_slice %303 {offsets = [0, 0], sizes = [8, 32], strides = [1, 1]} : vector<8x128xf32> to vector<8x32xf32>
    %306 = vector.extract_strided_slice %303 {offsets = [0, 32], sizes = [8, 32], strides = [1, 1]} : vector<8x128xf32> to vector<8x32xf32>
    %307 = vector.extract_strided_slice %304 {offsets = [0, 64], sizes = [8, 32], strides = [1, 1]} : vector<8x128xf32> to vector<8x32xf32>
    %308 = vector.extract_strided_slice %303 {offsets = [0, 96], sizes = [8, 32], strides = [1, 1]} : vector<8x128xf32> to vector<8x32xf32>
    %309 = arith.mulf %306, %271 : vector<8x32xf32>
    %310 = arith.mulf %305, %307 : vector<8x32xf32>
    %311 = arith.addf %309, %310 : vector<8x32xf32>
    %312 = math.tanh %311 : vector<8x32xf32>
    %313 = arith.mulf %308, %312 : vector<8x32xf32>
    %c56_95 = arith.constant 56 : index
    %c0_96 = arith.constant 0 : index
    %314 = vector.load %arg11[%c56_95, %c0_96] : memref<64x64xf32, #tpu.memory_space<vmem>>, vector<8x32xf32>
    tpu.vector_store %arg11[%c56_95, %c0_96], %313 {strides = array<i32>} : memref<64x64xf32, #tpu.memory_space<vmem>>, vector<8x32xf32>,
    %c0_97 = arith.constant 0 : index
    %c128_98 = arith.constant 128 : index
    %315 = vector.load %arg10[%c0_97, %c128_98] : memref<64x256xf32, #tpu.memory_space<vmem>>, vector<8x128xf32>
    %316 = arith.truncf %293 : vector<8x32xf32> to vector<8x32xbf16>
    %cst_99 = arith.constant dense<0.000000e+00> : vector<8x128xf32>
    %317 = tpu.matmul %316, %12, %cst_99 {dimension_numbers = #tpu.dot_dimension_numbers<[1], [0], [0], [1], [0, 0, 1, 1], [], []>} : vector<8x32xbf16>, vector<32x128xbf16>, vector<8x128xf32> -> vector<8x128xf32>
    %318 = arith.addf %315, %317 : vector<8x128xf32>
    %319 = arith.negf %318 : vector<8x128xf32>
    %320 = math.exp %319 : vector<8x128xf32>
    %cst_100 = arith.constant 1.000000e+00 : f32
    %321 = vector.broadcast %cst_100 : f32 to vector<8x128xf32>
    %322 = arith.addf %321, %320 : vector<8x128xf32>
    %323 = arith.divf %321, %322 : vector<8x128xf32>
    %324 = math.tanh %318 : vector<8x128xf32>
    %325 = vector.extract_strided_slice %323 {offsets = [0, 0], sizes = [8, 32], strides = [1, 1]} : vector<8x128xf32> to vector<8x32xf32>
    %326 = vector.extract_strided_slice %323 {offsets = [0, 32], sizes = [8, 32], strides = [1, 1]} : vector<8x128xf32> to vector<8x32xf32>
    %327 = vector.extract_strided_slice %324 {offsets = [0, 64], sizes = [8, 32], strides = [1, 1]} : vector<8x128xf32> to vector<8x32xf32>
    %328 = vector.extract_strided_slice %323 {offsets = [0, 96], sizes = [8, 32], strides = [1, 1]} : vector<8x128xf32> to vector<8x32xf32>
    %329 = arith.mulf %326, %291 : vector<8x32xf32>
    %330 = arith.mulf %325, %327 : vector<8x32xf32>
    %331 = arith.addf %329, %330 : vector<8x32xf32>
    %332 = math.tanh %331 : vector<8x32xf32>
    %333 = arith.mulf %328, %332 : vector<8x32xf32>
    %c0_101 = arith.constant 0 : index
    %c32_102 = arith.constant 32 : index
    %334 = vector.load %arg11[%c0_101, %c32_102] : memref<64x64xf32, #tpu.memory_space<vmem>>, vector<8x32xf32>
    tpu.vector_store %arg11[%c0_101, %c32_102], %333 {strides = array<i32>} : memref<64x64xf32, #tpu.memory_space<vmem>>, vector<8x32xf32>,
    %c0_103 = arith.constant 0 : index
    %c0_104 = arith.constant 0 : index
    %335 = vector.load %arg11[%c0_103, %c0_104] : memref<64x64xf32, #tpu.memory_space<vmem>>, vector<64x64xf32>
    %c0_105 = arith.constant 0 : index
    %c0_106 = arith.constant 0 : index
    %336 = vector.load %arg4[%c0_105, %c0_106] : memref<64x256xf32, #tpu.memory_space<vmem>>, vector<64x256xf32>
    %cst_107 = arith.constant dense<0.000000e+00> : vector<64x256xf32>
    %337 = tpu.matmul %335, %336, %cst_107 {dimension_numbers = #tpu.dot_dimension_numbers<[1], [0], [0], [1], [0, 0, 1, 1], [], []>} : vector<64x64xf32>, vector<64x256xf32>, vector<64x256xf32> -> vector<64x256xf32>
    %c0_108 = arith.constant 0 : index
    %c0_109 = arith.constant 0 : index
    %338 = vector.load %arg6[%c0_108, %c0_109] : memref<1x256xf32, #tpu.memory_space<vmem>>, vector<1x256xf32>
    %339 = vector.broadcast %338 : vector<1x256xf32> to vector<64x256xf32>
    %340 = arith.addf %337, %339 : vector<64x256xf32>
    %c0_110 = arith.constant 0 : index
    %c0_111 = arith.constant 0 : index
    %341 = vector.load %arg10[%c0_110, %c0_111] : memref<64x256xf32, #tpu.memory_space<vmem>>, vector<64x256xf32>
    tpu.vector_store %arg10[%c0_110, %c0_111], %340 {strides = array<i32>} : memref<64x256xf32, #tpu.memory_space<vmem>>, vector<64x256xf32>,
    %c0_112 = arith.constant 0 : index
    %c0_113 = arith.constant 0 : index
    %342 = vector.load %arg5[%c0_112, %c0_113] : memref<64x128xf32, #tpu.memory_space<vmem>>, vector<32x128xf32>
    %343 = arith.truncf %342 : vector<32x128xf32> to vector<32x128xbf16>
    %cst_114 = arith.constant 0.000000e+00 : f32
    %344 = vector.broadcast %cst_114 : f32 to vector<8x32xf32>
    %cst_115 = arith.constant 0.000000e+00 : f32
    %345 = vector.broadcast %cst_115 : f32 to vector<8x32xf32>
    %c56_116 = arith.constant 56 : index
    %c128_117 = arith.constant 128 : index
    %346 = vector.load %arg10[%c56_116, %c128_117] : memref<64x256xf32, #tpu.memory_space<vmem>>, vector<8x128xf32>
    %347 = arith.negf %346 : vector<8x128xf32>
    %348 = math.exp %347 : vector<8x128xf32>
    %cst_118 = arith.constant 1.000000e+00 : f32
    %349 = vector.broadcast %cst_118 : f32 to vector<8x128xf32>
    %350 = arith.addf %349, %348 : vector<8x128xf32>
    %351 = arith.divf %349, %350 : vector<8x128xf32>
    %352 = math.tanh %346 : vector<8x128xf32>
    %353 = vector.extract_strided_slice %351 {offsets = [0, 0], sizes = [8, 32], strides = [1, 1]} : vector<8x128xf32> to vector<8x32xf32>
    %354 = vector.extract_strided_slice %352 {offsets = [0, 64], sizes = [8, 32], strides = [1, 1]} : vector<8x128xf32> to vector<8x32xf32>
    %355 = vector.extract_strided_slice %351 {offsets = [0, 96], sizes = [8, 32], strides = [1, 1]} : vector<8x128xf32> to vector<8x32xf32>
    %356 = arith.mulf %353, %354 : vector<8x32xf32>
    %357 = math.tanh %356 : vector<8x32xf32>
    %358 = arith.mulf %355, %357 : vector<8x32xf32>
    %c0_119 = arith.constant 0 : index
    %c0_120 = arith.constant 0 : index
    %359 = vector.load %arg10[%c0_119, %c0_120] : memref<64x256xf32, #tpu.memory_space<vmem>>, vector<8x128xf32>
    %360 = arith.truncf %344 : vector<8x32xf32> to vector<8x32xbf16>
    %cst_121 = arith.constant dense<0.000000e+00> : vector<8x128xf32>
    %361 = tpu.matmul %360, %343, %cst_121 {dimension_numbers = #tpu.dot_dimension_numbers<[1], [0], [0], [1], [0, 0, 1, 1], [], []>} : vector<8x32xbf16>, vector<32x128xbf16>, vector<8x128xf32> -> vector<8x128xf32>
    %362 = arith.addf %359, %361 : vector<8x128xf32>
    %363 = arith.negf %362 : vector<8x128xf32>
    %364 = math.exp %363 : vector<8x128xf32>
    %cst_122 = arith.constant 1.000000e+00 : f32
    %365 = vector.broadcast %cst_122 : f32 to vector<8x128xf32>
    %366 = arith.addf %365, %364 : vector<8x128xf32>
    %367 = arith.divf %365, %366 : vector<8x128xf32>
    %368 = math.tanh %362 : vector<8x128xf32>
    %369 = vector.extract_strided_slice %367 {offsets = [0, 0], sizes = [8, 32], strides = [1, 1]} : vector<8x128xf32> to vector<8x32xf32>
    %370 = vector.extract_strided_slice %367 {offsets = [0, 32], sizes = [8, 32], strides = [1, 1]} : vector<8x128xf32> to vector<8x32xf32>
    %371 = vector.extract_strided_slice %368 {offsets = [0, 64], sizes = [8, 32], strides = [1, 1]} : vector<8x128xf32> to vector<8x32xf32>
    %372 = vector.extract_strided_slice %367 {offsets = [0, 96], sizes = [8, 32], strides = [1, 1]} : vector<8x128xf32> to vector<8x32xf32>
    %373 = arith.mulf %370, %345 : vector<8x32xf32>
    %374 = arith.mulf %369, %371 : vector<8x32xf32>
    %375 = arith.addf %373, %374 : vector<8x32xf32>
    %376 = math.tanh %375 : vector<8x32xf32>
    %377 = arith.mulf %372, %376 : vector<8x32xf32>
    %c8_123 = arith.constant 8 : index
    %c0_124 = arith.constant 0 : index
    %378 = vector.load %arg10[%c8_123, %c0_124] : memref<64x256xf32, #tpu.memory_space<vmem>>, vector<8x128xf32>
    %379 = arith.truncf %377 : vector<8x32xf32> to vector<8x32xbf16>
    %cst_125 = arith.constant dense<0.000000e+00> : vector<8x128xf32>
    %380 = tpu.matmul %379, %343, %cst_125 {dimension_numbers = #tpu.dot_dimension_numbers<[1], [0], [0], [1], [0, 0, 1, 1], [], []>} : vector<8x32xbf16>, vector<32x128xbf16>, vector<8x128xf32> -> vector<8x128xf32>
    %381 = arith.addf %378, %380 : vector<8x128xf32>
    %382 = arith.negf %381 : vector<8x128xf32>
    %383 = math.exp %382 : vector<8x128xf32>
    %cst_126 = arith.constant 1.000000e+00 : f32
    %384 = vector.broadcast %cst_126 : f32 to vector<8x128xf32>
    %385 = arith.addf %384, %383 : vector<8x128xf32>
    %386 = arith.divf %384, %385 : vector<8x128xf32>
    %387 = math.tanh %381 : vector<8x128xf32>
    %388 = vector.extract_strided_slice %386 {offsets = [0, 0], sizes = [8, 32], strides = [1, 1]} : vector<8x128xf32> to vector<8x32xf32>
    %389 = vector.extract_strided_slice %386 {offsets = [0, 32], sizes = [8, 32], strides = [1, 1]} : vector<8x128xf32> to vector<8x32xf32>
    %390 = vector.extract_strided_slice %387 {offsets = [0, 64], sizes = [8, 32], strides = [1, 1]} : vector<8x128xf32> to vector<8x32xf32>
    %391 = vector.extract_strided_slice %386 {offsets = [0, 96], sizes = [8, 32], strides = [1, 1]} : vector<8x128xf32> to vector<8x32xf32>
    %392 = arith.mulf %389, %375 : vector<8x32xf32>
    %393 = arith.mulf %388, %390 : vector<8x32xf32>
    %394 = arith.addf %392, %393 : vector<8x32xf32>
    %395 = math.tanh %394 : vector<8x32xf32>
    %396 = arith.mulf %391, %395 : vector<8x32xf32>
    %c16_127 = arith.constant 16 : index
    %c0_128 = arith.constant 0 : index
    %397 = vector.load %arg10[%c16_127, %c0_128] : memref<64x256xf32, #tpu.memory_space<vmem>>, vector<8x128xf32>
    %398 = arith.truncf %396 : vector<8x32xf32> to vector<8x32xbf16>
    %cst_129 = arith.constant dense<0.000000e+00> : vector<8x128xf32>
    %399 = tpu.matmul %398, %343, %cst_129 {dimension_numbers = #tpu.dot_dimension_numbers<[1], [0], [0], [1], [0, 0, 1, 1], [], []>} : vector<8x32xbf16>, vector<32x128xbf16>, vector<8x128xf32> -> vector<8x128xf32>
    %400 = arith.addf %397, %399 : vector<8x128xf32>
    %401 = arith.negf %400 : vector<8x128xf32>
    %402 = math.exp %401 : vector<8x128xf32>
    %cst_130 = arith.constant 1.000000e+00 : f32
    %403 = vector.broadcast %cst_130 : f32 to vector<8x128xf32>
    %404 = arith.addf %403, %402 : vector<8x128xf32>
    %405 = arith.divf %403, %404 : vector<8x128xf32>
    %406 = math.tanh %400 : vector<8x128xf32>
    %407 = vector.extract_strided_slice %405 {offsets = [0, 0], sizes = [8, 32], strides = [1, 1]} : vector<8x128xf32> to vector<8x32xf32>
    %408 = vector.extract_strided_slice %405 {offsets = [0, 32], sizes = [8, 32], strides = [1, 1]} : vector<8x128xf32> to vector<8x32xf32>
    %409 = vector.extract_strided_slice %406 {offsets = [0, 64], sizes = [8, 32], strides = [1, 1]} : vector<8x128xf32> to vector<8x32xf32>
    %410 = vector.extract_strided_slice %405 {offsets = [0, 96], sizes = [8, 32], strides = [1, 1]} : vector<8x128xf32> to vector<8x32xf32>
    %411 = arith.mulf %408, %394 : vector<8x32xf32>
    %412 = arith.mulf %407, %409 : vector<8x32xf32>
    %413 = arith.addf %411, %412 : vector<8x32xf32>
    %414 = math.tanh %413 : vector<8x32xf32>
    %415 = arith.mulf %410, %414 : vector<8x32xf32>
    %c24_131 = arith.constant 24 : index
    %c0_132 = arith.constant 0 : index
    %416 = vector.load %arg10[%c24_131, %c0_132] : memref<64x256xf32, #tpu.memory_space<vmem>>, vector<8x128xf32>
    %417 = arith.truncf %415 : vector<8x32xf32> to vector<8x32xbf16>
    %cst_133 = arith.constant dense<0.000000e+00> : vector<8x128xf32>
    %418 = tpu.matmul %417, %343, %cst_133 {dimension_numbers = #tpu.dot_dimension_numbers<[1], [0], [0], [1], [0, 0, 1, 1], [], []>} : vector<8x32xbf16>, vector<32x128xbf16>, vector<8x128xf32> -> vector<8x128xf32>
    %419 = arith.addf %416, %418 : vector<8x128xf32>
    %420 = arith.negf %419 : vector<8x128xf32>
    %421 = math.exp %420 : vector<8x128xf32>
    %cst_134 = arith.constant 1.000000e+00 : f32
    %422 = vector.broadcast %cst_134 : f32 to vector<8x128xf32>
    %423 = arith.addf %422, %421 : vector<8x128xf32>
    %424 = arith.divf %422, %423 : vector<8x128xf32>
    %425 = math.tanh %419 : vector<8x128xf32>
    %426 = vector.extract_strided_slice %424 {offsets = [0, 0], sizes = [8, 32], strides = [1, 1]} : vector<8x128xf32> to vector<8x32xf32>
    %427 = vector.extract_strided_slice %424 {offsets = [0, 32], sizes = [8, 32], strides = [1, 1]} : vector<8x128xf32> to vector<8x32xf32>
    %428 = vector.extract_strided_slice %425 {offsets = [0, 64], sizes = [8, 32], strides = [1, 1]} : vector<8x128xf32> to vector<8x32xf32>
    %429 = vector.extract_strided_slice %424 {offsets = [0, 96], sizes = [8, 32], strides = [1, 1]} : vector<8x128xf32> to vector<8x32xf32>
    %430 = arith.mulf %427, %413 : vector<8x32xf32>
    %431 = arith.mulf %426, %428 : vector<8x32xf32>
    %432 = arith.addf %430, %431 : vector<8x32xf32>
    %433 = math.tanh %432 : vector<8x32xf32>
    %434 = arith.mulf %429, %433 : vector<8x32xf32>
    %c32_135 = arith.constant 32 : index
    %c0_136 = arith.constant 0 : index
    %435 = vector.load %arg10[%c32_135, %c0_136] : memref<64x256xf32, #tpu.memory_space<vmem>>, vector<8x128xf32>
    %436 = arith.truncf %434 : vector<8x32xf32> to vector<8x32xbf16>
    %cst_137 = arith.constant dense<0.000000e+00> : vector<8x128xf32>
    %437 = tpu.matmul %436, %343, %cst_137 {dimension_numbers = #tpu.dot_dimension_numbers<[1], [0], [0], [1], [0, 0, 1, 1], [], []>} : vector<8x32xbf16>, vector<32x128xbf16>, vector<8x128xf32> -> vector<8x128xf32>
    %438 = arith.addf %435, %437 : vector<8x128xf32>
    %439 = arith.negf %438 : vector<8x128xf32>
    %440 = math.exp %439 : vector<8x128xf32>
    %cst_138 = arith.constant 1.000000e+00 : f32
    %441 = vector.broadcast %cst_138 : f32 to vector<8x128xf32>
    %442 = arith.addf %441, %440 : vector<8x128xf32>
    %443 = arith.divf %441, %442 : vector<8x128xf32>
    %444 = math.tanh %438 : vector<8x128xf32>
    %445 = vector.extract_strided_slice %443 {offsets = [0, 0], sizes = [8, 32], strides = [1, 1]} : vector<8x128xf32> to vector<8x32xf32>
    %446 = vector.extract_strided_slice %443 {offsets = [0, 32], sizes = [8, 32], strides = [1, 1]} : vector<8x128xf32> to vector<8x32xf32>
    %447 = vector.extract_strided_slice %444 {offsets = [0, 64], sizes = [8, 32], strides = [1, 1]} : vector<8x128xf32> to vector<8x32xf32>
    %448 = vector.extract_strided_slice %443 {offsets = [0, 96], sizes = [8, 32], strides = [1, 1]} : vector<8x128xf32> to vector<8x32xf32>
    %449 = arith.mulf %446, %432 : vector<8x32xf32>
    %450 = arith.mulf %445, %447 : vector<8x32xf32>
    %451 = arith.addf %449, %450 : vector<8x32xf32>
    %452 = math.tanh %451 : vector<8x32xf32>
    %453 = arith.mulf %448, %452 : vector<8x32xf32>
    %c40_139 = arith.constant 40 : index
    %c0_140 = arith.constant 0 : index
    %454 = vector.load %arg10[%c40_139, %c0_140] : memref<64x256xf32, #tpu.memory_space<vmem>>, vector<8x128xf32>
    %455 = arith.truncf %453 : vector<8x32xf32> to vector<8x32xbf16>
    %cst_141 = arith.constant dense<0.000000e+00> : vector<8x128xf32>
    %456 = tpu.matmul %455, %343, %cst_141 {dimension_numbers = #tpu.dot_dimension_numbers<[1], [0], [0], [1], [0, 0, 1, 1], [], []>} : vector<8x32xbf16>, vector<32x128xbf16>, vector<8x128xf32> -> vector<8x128xf32>
    %457 = arith.addf %454, %456 : vector<8x128xf32>
    %458 = arith.negf %457 : vector<8x128xf32>
    %459 = math.exp %458 : vector<8x128xf32>
    %cst_142 = arith.constant 1.000000e+00 : f32
    %460 = vector.broadcast %cst_142 : f32 to vector<8x128xf32>
    %461 = arith.addf %460, %459 : vector<8x128xf32>
    %462 = arith.divf %460, %461 : vector<8x128xf32>
    %463 = math.tanh %457 : vector<8x128xf32>
    %464 = vector.extract_strided_slice %462 {offsets = [0, 0], sizes = [8, 32], strides = [1, 1]} : vector<8x128xf32> to vector<8x32xf32>
    %465 = vector.extract_strided_slice %462 {offsets = [0, 32], sizes = [8, 32], strides = [1, 1]} : vector<8x128xf32> to vector<8x32xf32>
    %466 = vector.extract_strided_slice %463 {offsets = [0, 64], sizes = [8, 32], strides = [1, 1]} : vector<8x128xf32> to vector<8x32xf32>
    %467 = vector.extract_strided_slice %462 {offsets = [0, 96], sizes = [8, 32], strides = [1, 1]} : vector<8x128xf32> to vector<8x32xf32>
    %468 = arith.mulf %465, %451 : vector<8x32xf32>
    %469 = arith.mulf %464, %466 : vector<8x32xf32>
    %470 = arith.addf %468, %469 : vector<8x32xf32>
    %471 = math.tanh %470 : vector<8x32xf32>
    %472 = arith.mulf %467, %471 : vector<8x32xf32>
    %c48_143 = arith.constant 48 : index
    %c0_144 = arith.constant 0 : index
    %473 = vector.load %arg10[%c48_143, %c0_144] : memref<64x256xf32, #tpu.memory_space<vmem>>, vector<8x128xf32>
    %474 = arith.truncf %472 : vector<8x32xf32> to vector<8x32xbf16>
    %cst_145 = arith.constant dense<0.000000e+00> : vector<8x128xf32>
    %475 = tpu.matmul %474, %343, %cst_145 {dimension_numbers = #tpu.dot_dimension_numbers<[1], [0], [0], [1], [0, 0, 1, 1], [], []>} : vector<8x32xbf16>, vector<32x128xbf16>, vector<8x128xf32> -> vector<8x128xf32>
    %476 = arith.addf %473, %475 : vector<8x128xf32>
    %477 = arith.negf %476 : vector<8x128xf32>
    %478 = math.exp %477 : vector<8x128xf32>
    %cst_146 = arith.constant 1.000000e+00 : f32
    %479 = vector.broadcast %cst_146 : f32 to vector<8x128xf32>
    %480 = arith.addf %479, %478 : vector<8x128xf32>
    %481 = arith.divf %479, %480 : vector<8x128xf32>
    %482 = math.tanh %476 : vector<8x128xf32>
    %483 = vector.extract_strided_slice %481 {offsets = [0, 0], sizes = [8, 32], strides = [1, 1]} : vector<8x128xf32> to vector<8x32xf32>
    %484 = vector.extract_strided_slice %481 {offsets = [0, 32], sizes = [8, 32], strides = [1, 1]} : vector<8x128xf32> to vector<8x32xf32>
    %485 = vector.extract_strided_slice %482 {offsets = [0, 64], sizes = [8, 32], strides = [1, 1]} : vector<8x128xf32> to vector<8x32xf32>
    %486 = vector.extract_strided_slice %481 {offsets = [0, 96], sizes = [8, 32], strides = [1, 1]} : vector<8x128xf32> to vector<8x32xf32>
    %487 = arith.mulf %484, %470 : vector<8x32xf32>
    %488 = arith.mulf %483, %485 : vector<8x32xf32>
    %489 = arith.addf %487, %488 : vector<8x32xf32>
    %490 = math.tanh %489 : vector<8x32xf32>
    %491 = arith.mulf %486, %490 : vector<8x32xf32>
    %c56_147 = arith.constant 56 : index
    %c0_148 = arith.constant 0 : index
    %492 = vector.load %arg10[%c56_147, %c0_148] : memref<64x256xf32, #tpu.memory_space<vmem>>, vector<8x128xf32>
    %493 = arith.truncf %491 : vector<8x32xf32> to vector<8x32xbf16>
    %cst_149 = arith.constant dense<0.000000e+00> : vector<8x128xf32>
    %494 = tpu.matmul %493, %343, %cst_149 {dimension_numbers = #tpu.dot_dimension_numbers<[1], [0], [0], [1], [0, 0, 1, 1], [], []>} : vector<8x32xbf16>, vector<32x128xbf16>, vector<8x128xf32> -> vector<8x128xf32>
    %495 = arith.addf %492, %494 : vector<8x128xf32>
    %496 = arith.negf %495 : vector<8x128xf32>
    %497 = math.exp %496 : vector<8x128xf32>
    %cst_150 = arith.constant 1.000000e+00 : f32
    %498 = vector.broadcast %cst_150 : f32 to vector<8x128xf32>
    %499 = arith.addf %498, %497 : vector<8x128xf32>
    %500 = arith.divf %498, %499 : vector<8x128xf32>
    %501 = math.tanh %495 : vector<8x128xf32>
    %502 = vector.extract_strided_slice %500 {offsets = [0, 0], sizes = [8, 32], strides = [1, 1]} : vector<8x128xf32> to vector<8x32xf32>
    %503 = vector.extract_strided_slice %500 {offsets = [0, 32], sizes = [8, 32], strides = [1, 1]} : vector<8x128xf32> to vector<8x32xf32>
    %504 = vector.extract_strided_slice %501 {offsets = [0, 64], sizes = [8, 32], strides = [1, 1]} : vector<8x128xf32> to vector<8x32xf32>
    %505 = vector.extract_strided_slice %500 {offsets = [0, 96], sizes = [8, 32], strides = [1, 1]} : vector<8x128xf32> to vector<8x32xf32>
    %506 = arith.mulf %503, %489 : vector<8x32xf32>
    %507 = arith.mulf %502, %504 : vector<8x32xf32>
    %508 = arith.addf %506, %507 : vector<8x32xf32>
    %509 = math.tanh %508 : vector<8x32xf32>
    %510 = arith.mulf %505, %509 : vector<8x32xf32>
    %c0_151 = arith.constant 0 : index
    %c0_152 = arith.constant 0 : index
    %511 = vector.load %arg7[%c0_151, %c0_152] : memref<64x9xf32, #tpu.memory_space<vmem>>, vector<32x9xf32>
    %cst_153 = arith.constant dense<0.000000e+00> : vector<8x9xf32>
    %512 = tpu.matmul %510, %511, %cst_153 {dimension_numbers = #tpu.dot_dimension_numbers<[1], [0], [0], [1], [0, 0, 1, 1], [], []>} : vector<8x32xf32>, vector<32x9xf32>, vector<8x9xf32> -> vector<8x9xf32>
    %c32_154 = arith.constant 32 : index
    %c0_155 = arith.constant 0 : index
    %513 = vector.load %arg7[%c32_154, %c0_155] : memref<64x9xf32, #tpu.memory_space<vmem>>, vector<32x9xf32>
    %cst_156 = arith.constant dense<0.000000e+00> : vector<8x9xf32>
    %514 = tpu.matmul %358, %513, %cst_156 {dimension_numbers = #tpu.dot_dimension_numbers<[1], [0], [0], [1], [0, 0, 1, 1], [], []>} : vector<8x32xf32>, vector<32x9xf32>, vector<8x9xf32> -> vector<8x9xf32>
    %515 = arith.addf %512, %514 : vector<8x9xf32>
    %c0_157 = arith.constant 0 : index
    %c0_158 = arith.constant 0 : index
    %516 = vector.load %arg8[%c0_157, %c0_158] : memref<1x9xf32, #tpu.memory_space<vmem>>, vector<1x9xf32>
    %517 = vector.broadcast %516 : vector<1x9xf32> to vector<8x9xf32>
    %518 = arith.addf %515, %517 : vector<8x9xf32>
    %c0_159 = arith.constant 0 : index
    %c0_160 = arith.constant 0 : index
    %519 = vector.load %arg9[%c0_159, %c0_160] : memref<8x9xf32, #tpu.memory_space<vmem>>, vector<8x9xf32>
    tpu.vector_store %arg9[%c0_159, %c0_160], %518 {strides = array<i32>} : memref<8x9xf32, #tpu.memory_space<vmem>>, vector<8x9xf32>,
    return
  }
}

</mosaic_0001>

<llo_original>
// kernel: rnn_forward.1
$region0: #{rnn_forward.1}
  #allocation0 [shape = 'u32[]', space=smem, size = 0x4, offset = 0x4, fixed_abs, tag = 'smem constant byte address 0x4 - core index']
  #allocation1 [shape = 'u32[72,128]{1,0:T(1,128)}', space=vmem, size = 0x9000, scoped, tag = 'internal scratch']
  #allocation2 [shape = 'f32[64,256]{1,0:T(8,128)}', space=vmem, size = 0x10000, scoped, tag = 'scratch operand']
  #allocation3 [shape = 'f32[64,64]{1,0:T(8,128)}', space=vmem, size = 0x8000, scoped, tag = 'scratch operand']
  %s0 = inlined_call_operand.vmem [shape: f32[64,26], index: 0, kind: input, shape index: {}]
  %s1 = inlined_call_operand.vmem [shape: f32[26,256], index: 1, kind: input, shape index: {}]
  %s2 = inlined_call_operand.vmem [shape: f32[64,128], index: 2, kind: input, shape index: {}]
  %s3 = inlined_call_operand.vmem [shape: f32[1,256], index: 3, kind: input, shape index: {}]
  %s4 = inlined_call_operand.vmem [shape: f32[64,256], index: 4, kind: input, shape index: {}]
  %s5 = inlined_call_operand.vmem [shape: f32[64,128], index: 5, kind: input, shape index: {}]
  %s6 = inlined_call_operand.vmem [shape: f32[1,256], index: 6, kind: input, shape index: {}]
  %s7 = inlined_call_operand.vmem [shape: f32[64,9], index: 7, kind: input, shape index: {}]
  %s8 = inlined_call_operand.vmem [shape: f32[1,9], index: 8, kind: input, shape index: {}]
  %s9 = inlined_call_operand.vmem [shape: f32[8,9], index: 9, kind: output, shape index: {}]
  %s10 = sld [smem:[#allocation0]]
  $region46: #{rnn_forward.1} parent=0
    _
  %s12 = ssub.s32 1, %s10
  %s13 = scalar_select 0, %s12, %s10
  // Predicated region
  $region2: #{rnn_forward.1} parent=0 // pred_check
    _
  $region3: #{rnn_forward.1} parent=0 // pred_check_branch
    %15 = sbr.rel (0) target = $region5
  $region4: #{rnn_forward.1} parent=0 // pred_region
    _
  $region5: #{rnn_forward.1} parent=0 // pred_fallthru
    _
  // Predicated region
  $region6: #{rnn_forward.1} parent=0 // pred_check
    _
  $region7: #{rnn_forward.1} parent=0 // pred_check_branch
    %17 = sbr.rel (0) target = $region9
  $region8: #{rnn_forward.1} parent=0 // pred_region
    _
  $region9: #{rnn_forward.1} parent=0 // pred_fallthru
    _
  // Predicated region
  $region10: #{rnn_forward.1} parent=0 // pred_check
    _
  $region11: #{rnn_forward.1} parent=0 // pred_check_branch
    %19 = sbr.rel (0) target = $region13
  $region12: #{rnn_forward.1} parent=0 // pred_region
    _
  $region13: #{rnn_forward.1} parent=0 // pred_fallthru
    _
  // Predicated region
  $region14: #{rnn_forward.1} parent=0 // pred_check
    _
  $region15: #{rnn_forward.1} parent=0 // pred_check_branch
    %21 = sbr.rel (0) target = $region17
  $region16: #{rnn_forward.1} parent=0 // pred_region
    _
  $region17: #{rnn_forward.1} parent=0 // pred_fallthru
    _
  // Predicated region
  $region18: #{rnn_forward.1} parent=0 // pred_check
    _
  $region19: #{rnn_forward.1} parent=0 // pred_check_branch
    %23 = sbr.rel (0) target = $region21
  $region20: #{rnn_forward.1} parent=0 // pred_region
    _
  $region21: #{rnn_forward.1} parent=0 // pred_fallthru
    _
  // Predicated region
  $region22: #{rnn_forward.1} parent=0 // pred_check
    _
  $region23: #{rnn_forward.1} parent=0 // pred_check_branch
    %25 = sbr.rel (0) target = $region25
  $region24: #{rnn_forward.1} parent=0 // pred_region
    _
  $region25: #{rnn_forward.1} parent=0 // pred_fallthru
    _
  // Predicated region
  $region26: #{rnn_forward.1} parent=0 // pred_check
    _
  $region27: #{rnn_forward.1} parent=0 // pred_check_branch
    %27 = sbr.rel (0) target = $region29
  $region28: #{rnn_forward.1} parent=0 // pred_region
    _
  $region29: #{rnn_forward.1} parent=0 // pred_fallthru
    _
  // Predicated region
  $region30: #{rnn_forward.1} parent=0 // pred_check
    _
  $region31: #{rnn_forward.1} parent=0 // pred_check_branch
    %29 = sbr.rel (0) target = $region33
  $region32: #{rnn_forward.1} parent=0 // pred_region
    _
  $region33: #{rnn_forward.1} parent=0 // pred_fallthru
    _
  // Predicated region
  $region34: #{rnn_forward.1} parent=0 // pred_check
    _
  $region35: #{rnn_forward.1} parent=0 // pred_check_branch
    %31 = sbr.rel (0) target = $region37
  $region36: #{rnn_forward.1} parent=0 // pred_region
    _
  $region37: #{rnn_forward.1} parent=0 // pred_fallthru
    _
  %v33 = vld [vmem:[%s0] sm:$0xff]
  %v34 = vld [vmem:[%s0 + $0x8] sm:$0xff]
  %v35 = vld [vmem:[%s0 + $0x10] sm:$0xff]
  %v36 = vld [vmem:[%s0 + $0x18] sm:$0xff]
  %v37 = vld [vmem:[%s0 + $0x20] sm:$0xff]
  %v38 = vld [vmem:[%s0 + $0x28] sm:$0xff]
  %v39 = vld [vmem:[%s0 + $0x30] sm:$0xff]
  %v40 = vld [vmem:[%s0 + $0x38] sm:$0xff]
  %v41 = vld [vmem:[%s1] sm:$0xff]
  %v42 = vld [vmem:[%s1 + $0x8] sm:$0xff]
  %v43 = vld [vmem:[%s1 + $0x10] sm:$0xff]
  %v44 = vld [vmem:[%s1 + $0x18] sm:$0xff]
  %v45 = vld [vmem:[%s1 + $0x20] sm:$0xff]
  %v46 = vld [vmem:[%s1 + $0x28] sm:$0xff]
  %v47 = vld [vmem:[%s1 + $0x30] sm:$0x3]
  %v48 = vld [vmem:[%s1 + $0x38] sm:$0x3]
  %v49 = vld [vmem:[%s3] sm:$0x3]
  %v51 = vperm.slane %v49, 0
  %v52 = vperm.slane %v49, 1
  %vm55 = vcmask 211968
  %v57 = vsel %vm55, %v33, 0
  %v60 = vsel %vm55, %v34, 0
  %v63 = vsel %vm55, %v35, 0
  %v66 = vsel %vm55, %v36, 0
  %v69 = vsel %vm55, %v37, 0
  %v72 = vsel %vm55, %v38, 0
  %v75 = vsel %vm55, %v39, 0
  %v78 = vsel %vm55, %v40, 0
  %vm80 = vcmask 1041408
  %v82 = vsel %vm80, %v47, 0
  %v85 = vsel %vm80, %v48, 0
  %87 = vmatpush.msra.mxu0 0.0
  %88 = vmatpush.msra.mxu0 0.0
  %89 = vmatpush.msra.mxu0 0.0
  %90 = vmatpush.msra.mxu0 0.0
  %91 = vmatpush.msra.mxu0 0.0
  %92 = vmatpush.msra.mxu0 0.0
  %93 = vmatpush.msra.mxu0 0.0
  %94 = vmatpush.msra.mxu0 0.0
  %95 = vmatpush.msra.mxu0 0.0
  %96 = vmatpush.msra.mxu0 0.0
  %97 = vmatpush.msra.mxu0 0.0
  %98 = vmatpush.msra.mxu0 0.0
  %99 = vmatpush.msra.mxu0 %v82
  %100 = vmatpush.msra.mxu0 %v45
  %101 = vmatpush.msra.mxu0 %v43
  %102 = vmatpush.msra.mxu0 %v41
  %103 = vmatmul.f32.gmra.mxu0 %v57
  %v104 = vpop.f32.mrf.mxu0
  %v105 = vadd.f32 %v51, %v104
  %106 = vmatmul.f32.gmra.mxu0 %v60
  %v107 = vpop.f32.mrf.mxu0
  %v108 = vadd.f32 %v51, %v107
  %109 = vmatmul.f32.gmra.mxu0 %v63
  %v110 = vpop.f32.mrf.mxu0
  %v111 = vadd.f32 %v51, %v110
  %112 = vmatmul.f32.gmra.mxu0 %v66
  %v113 = vpop.f32.mrf.mxu0
  %v114 = vadd.f32 %v51, %v113
  %115 = vmatmul.f32.gmra.mxu0 %v69
  %v116 = vpop.f32.mrf.mxu0
  %v117 = vadd.f32 %v51, %v116
  %118 = vmatmul.f32.gmra.mxu0 %v72
  %v119 = vpop.f32.mrf.mxu0
  %v120 = vadd.f32 %v51, %v119
  %121 = vmatmul.f32.gmra.mxu0 %v75
  %v122 = vpop.f32.mrf.mxu0
  %v123 = vadd.f32 %v51, %v122
  %124 = vmatmul.f32.gmra.mxu0 %v78
  %v125 = vpop.f32.mrf.mxu0
  %v126 = vadd.f32 %v51, %v125
  %127 = vdwg.mxu0
  %128 = vmatpush.msra.mxu0 0.0
  %129 = vmatpush.msra.mxu0 0.0
  %130 = vmatpush.msra.mxu0 0.0
  %131 = vmatpush.msra.mxu0 0.0
  %132 = vmatpush.msra.mxu0 0.0
  %133 = vmatpush.msra.mxu0 0.0
  %134 = vmatpush.msra.mxu0 0.0
  %135 = vmatpush.msra.mxu0 0.0
  %136 = vmatpush.msra.mxu0 0.0
  %137 = vmatpush.msra.mxu0 0.0
  %138 = vmatpush.msra.mxu0 0.0
  %139 = vmatpush.msra.mxu0 0.0
  %140 = vmatpush.msra.mxu0 %v85
  %141 = vmatpush.msra.mxu0 %v46
  %142 = vmatpush.msra.mxu0 %v44
  %143 = vmatpush.msra.mxu0 %v42
  %144 = vmatmul.f32.gmra.mxu0 %v57
  %v145 = vpop.f32.mrf.mxu0
  %v146 = vadd.f32 %v52, %v145
  %147 = vmatmul.f32.gmra.mxu0 %v60
  %v148 = vpop.f32.mrf.mxu0
  %v149 = vadd.f32 %v52, %v148
  %150 = vmatmul.f32.gmra.mxu0 %v63
  %v151 = vpop.f32.mrf.mxu0
  %v152 = vadd.f32 %v52, %v151
  %153 = vmatmul.f32.gmra.mxu0 %v66
  %v154 = vpop.f32.mrf.mxu0
  %v155 = vadd.f32 %v52, %v154
  %156 = vmatmul.f32.gmra.mxu0 %v69
  %v157 = vpop.f32.mrf.mxu0
  %v158 = vadd.f32 %v52, %v157
  %159 = vmatmul.f32.gmra.mxu0 %v72
  %v160 = vpop.f32.mrf.mxu0
  %v161 = vadd.f32 %v52, %v160
  %162 = vmatmul.f32.gmra.mxu0 %v75
  %v163 = vpop.f32.mrf.mxu0
  %v164 = vadd.f32 %v52, %v163
  %165 = vmatmul.f32.gmra.mxu0 %v78
  %v166 = vpop.f32.mrf.mxu0
  %v167 = vadd.f32 %v52, %v166
  %168 = vdwg.mxu0
  %169 = vst [vmem:[#allocation2] sm:$0xff] %v105
  %170 = vst [vmem:[#allocation2 + $0x8] sm:$0xff] %v146
  %171 = vst [vmem:[#allocation2 + $0x10] sm:$0xff] %v108
  %172 = vst [vmem:[#allocation2 + $0x18] sm:$0xff] %v149
  %173 = vst [vmem:[#allocation2 + $0x20] sm:$0xff] %v111
  %174 = vst [vmem:[#allocation2 + $0x28] sm:$0xff] %v152
  %175 = vst [vmem:[#allocation2 + $0x30] sm:$0xff] %v114
  %176 = vst [vmem:[#allocation2 + $0x38] sm:$0xff] %v155
  %177 = vst [vmem:[#allocation2 + $0x40] sm:$0xff] %v117
  %178 = vst [vmem:[#allocation2 + $0x48] sm:$0xff] %v158
  %179 = vst [vmem:[#allocation2 + $0x50] sm:$0xff] %v120
  %180 = vst [vmem:[#allocation2 + $0x58] sm:$0xff] %v161
  %181 = vst [vmem:[#allocation2 + $0x60] sm:$0xff] %v123
  %182 = vst [vmem:[#allocation2 + $0x68] sm:$0xff] %v164
  %183 = vst [vmem:[#allocation2 + $0x70] sm:$0xff] %v126
  %184 = vst [vmem:[#allocation2 + $0x78] sm:$0xff] %v167
  %v185 = vld [vmem:[%s2] sm:$0xff]
  %v186 = vld [vmem:[%s2 + $0x8] sm:$0xff]
  %v187 = vld [vmem:[%s2 + $0x10] sm:$0xff]
  %v188 = vld [vmem:[%s2 + $0x18] sm:$0xff]
  %v189 = vpack.c.bf16 %v186, %v185
  %v190 = vpack.c.bf16 %v188, %v187
  %v191 = vld [vmem:[%s2 + $0x20] sm:$0xff]
  %v192 = vld [vmem:[%s2 + $0x28] sm:$0xff]
  %v193 = vld [vmem:[%s2 + $0x30] sm:$0xff]
  %v194 = vld [vmem:[%s2 + $0x38] sm:$0xff]
  %v195 = vpack.c.bf16 %v192, %v191
  %v196 = vpack.c.bf16 %v194, %v193
  %v197 = vld [vmem:[#allocation2] sm:$0xff]
  %vm198 = vcmask 261120
  %v200 = vsel %vm198, 0, 0
  %202 = vmatpush.bf16.msra.mxu0 0
  %203 = vmatpush.bf16.msra.mxu0 0
  %204 = vmatpush.bf16.msra.mxu0 0
  %205 = vmatpush.bf16.msra.mxu0 0
  %206 = vmatpush.bf16.msra.mxu0 0
  %207 = vmatpush.bf16.msra.mxu0 0
  %208 = vmatpush.bf16.msra.mxu0 %v190
  %209 = vmatpush.bf16.msra.mxu0 %v189
  %210 = vmatmul.bf16.gmra.mxu0 %v200
  %v211 = vpop.f32.mrf.mxu0
  %v212 = vadd.f32 0.0, %v211
  %v213 = vpop.f32.mrf.mxu0
  %214 = vdwg.mxu0
  %v215 = vadd.f32 %v197, %v212
  %v216 = vxor.u32 %v215, 2147483648
  %v217 = vmul.f32 %v216, 1.442695
  %v218 = vpow.pop %v217
  %v219 = vadd.f32 %v218, 1.0
  %v220 = vrcp.pop %v219
  %v221 = vmul.f32 %v219, %v220
  %v222 = vsub.f32 1.0, %v221
  %v223 = vmul.f32 %v220, %v222
  %v224 = vadd.f32 %v220, %v223
  %vm225 = vweird.f32 %v219
  %vm226 = vweird.f32 %v220
  %vm227 = vmor %vm225, %vm226
  %v228 = vsel %vm227, %v220, %v224
  %v229 = vand.u32 2147483647, %v219
  %vm230 = vcmp.eq.f32.partialorder %v229, 8.507059e+37
  %v231 = vand.u32 %v219, 2147483648
  %v232 = vor.u32 1.1754944e-38, %v231
  %v233 = vsel %vm230, %v232, %v228
  %v234 = vmul.f32 1.0, %v233
  %v235 = vtanh.pop %v215
  %v236 = vmul.f32 %v234, 0.0
  %238 = vrot.lane.b32.xlu0 %v235, 64
  %v239 = vpop.permute.xlu0 %238
  %v241 = vmul.f32 %v234, %v239
  %243 = vrot.lane.b32.xlu0 %v241, 32
  %v244 = vpop.permute.xlu0 %243
  %v246 = vadd.f32 %v236, %v244
  %v247 = vtanh.pop %v246
  %249 = vrot.lane.b32.xlu0 %v247, 64
  %v250 = vpop.permute.xlu0 %249
  %v252 = vmul.f32 %v234, %v250
  %254 = vrot.lane.b32.xlu0 %v252, 32
  %v255 = vpop.permute.xlu0 %254
  %257 = vst.msk [vmem:[#allocation3] sm:$0xff] %vm198, %v255
  %v258 = vld [vmem:[#allocation2 + $0x78] sm:$0xff]
  %259 = vmatpush.bf16.msra.mxu0 0
  %260 = vmatpush.bf16.msra.mxu0 0
  %261 = vmatpush.bf16.msra.mxu0 0
  %262 = vmatpush.bf16.msra.mxu0 0
  %263 = vmatpush.bf16.msra.mxu0 0
  %264 = vmatpush.bf16.msra.mxu0 0
  %265 = vmatpush.bf16.msra.mxu0 %v196
  %266 = vmatpush.bf16.msra.mxu0 %v195
  %267 = vmatmul.bf16.gmra.mxu0 %v200
  %v268 = vpop.f32.mrf.mxu0
  %v269 = vadd.f32 0.0, %v268
  %v270 = vpop.f32.mrf.mxu0
  %271 = vdwg.mxu0
  %v272 = vadd.f32 %v258, %v269
  %v273 = vxor.u32 %v272, 2147483648
  %v274 = vmul.f32 %v273, 1.442695
  %v275 = vpow.pop %v274
  %v276 = vadd.f32 %v275, 1.0
  %v277 = vrcp.pop %v276
  %v278 = vmul.f32 %v276, %v277
  %v279 = vsub.f32 1.0, %v278
  %v280 = vmul.f32 %v277, %v279
  %v281 = vadd.f32 %v277, %v280
  %vm282 = vweird.f32 %v276
  %vm283 = vweird.f32 %v277
  %vm284 = vmor %vm282, %vm283
  %v285 = vsel %vm284, %v277, %v281
  %v286 = vand.u32 2147483647, %v276
  %vm287 = vcmp.eq.f32.partialorder %v286, 8.507059e+37
  %v288 = vand.u32 %v276, 2147483648
  %v289 = vor.u32 1.1754944e-38, %v288
  %v290 = vsel %vm287, %v289, %v285
  %v291 = vmul.f32 1.0, %v290
  %v292 = vtanh.pop %v272
  %v293 = vmul.f32 %v291, 0.0
  %295 = vrot.lane.b32.xlu0 %v292, 64
  %v296 = vpop.permute.xlu0 %295
  %v298 = vmul.f32 %v291, %v296
  %300 = vrot.lane.b32.xlu0 %v298, 32
  %v301 = vpop.permute.xlu0 %300
  %v303 = vadd.f32 %v293, %v301
  %v304 = vtanh.pop %v303
  %306 = vrot.lane.b32.xlu0 %v304, 64
  %v307 = vpop.permute.xlu0 %306
  %v309 = vmul.f32 %v291, %v307
  %311 = vrot.lane.b32.xlu0 %v309, 64
  %v312 = vpop.permute.xlu0 %311
  %vm314 = vcmask 523520
  %315 = vst.msk [vmem:[#allocation3 + $0x38] sm:$0xff] %vm314, %v312
  %v316 = vld [vmem:[#allocation2 + $0x10] sm:$0xff]
  %v317 = vpack.c.bf16 %v252, %v252
  %319 = vrot.lane.b32.xlu0 %v317, 32
  %v320 = vpop.permute.xlu0 %319
  %v322 = vsel %vm198, %v320, 0
  %324 = vmatpush.bf16.msra.mxu0 0
  %325 = vmatpush.bf16.msra.mxu0 0
  %326 = vmatpush.bf16.msra.mxu0 0
  %327 = vmatpush.bf16.msra.mxu0 0
  %328 = vmatpush.bf16.msra.mxu0 0
  %329 = vmatpush.bf16.msra.mxu0 0
  %330 = vmatpush.bf16.msra.mxu0 %v190
  %331 = vmatpush.bf16.msra.mxu0 %v189
  %332 = vmatmul.bf16.gmra.mxu0 %v322
  %v333 = vpop.f32.mrf.mxu0
  %v334 = vadd.f32 0.0, %v333
  %v335 = vpop.f32.mrf.mxu0
  %336 = vdwg.mxu0
  %v337 = vadd.f32 %v316, %v334
  %v338 = vxor.u32 %v337, 2147483648
  %v339 = vmul.f32 %v338, 1.442695
  %v340 = vpow.pop %v339
  %v341 = vadd.f32 %v340, 1.0
  %v342 = vrcp.pop %v341
  %v343 = vmul.f32 %v341, %v342
  %v344 = vsub.f32 1.0, %v343
  %v345 = vmul.f32 %v342, %v344
  %v346 = vadd.f32 %v342, %v345
  %vm347 = vweird.f32 %v341
  %vm348 = vweird.f32 %v342
  %vm349 = vmor %vm347, %vm348
  %v350 = vsel %vm349, %v342, %v346
  %v351 = vand.u32 2147483647, %v341
  %vm352 = vcmp.eq.f32.partialorder %v351, 8.507059e+37
  %v353 = vand.u32 %v341, 2147483648
  %v354 = vor.u32 1.1754944e-38, %v353
  %v355 = vsel %vm352, %v354, %v350
  %v356 = vmul.f32 1.0, %v355
  %v357 = vtanh.pop %v337
  %v358 = vmul.f32 %v356, %v246
  %360 = vrot.lane.b32.xlu0 %v357, 64
  %v361 = vpop.permute.xlu0 %360
  %v363 = vmul.f32 %v356, %v361
  %365 = vrot.lane.b32.xlu0 %v363, 32
  %v366 = vpop.permute.xlu0 %365
  %v368 = vadd.f32 %v358, %v366
  %v369 = vtanh.pop %v368
  %371 = vrot.lane.b32.xlu0 %v369, 64
  %v372 = vpop.permute.xlu0 %371
  %v374 = vmul.f32 %v356, %v372
  %376 = vrot.lane.b32.xlu0 %v374, 32
  %v377 = vpop.permute.xlu0 %376
  %379 = vst.msk [vmem:[#allocation3 + $0x8] sm:$0xff] %vm198, %v377
  %v380 = vld [vmem:[#allocation2 + $0x68] sm:$0xff]
  %v381 = vpack.c.bf16 %v309, %v309
  %383 = vrot.lane.b32.xlu0 %v381, 32
  %v384 = vpop.permute.xlu0 %383
  %v386 = vsel %vm198, %v384, 0
  %388 = vmatpush.bf16.msra.mxu0 0
  %389 = vmatpush.bf16.msra.mxu0 0
  %390 = vmatpush.bf16.msra.mxu0 0
  %391 = vmatpush.bf16.msra.mxu0 0
  %392 = vmatpush.bf16.msra.mxu0 0
  %393 = vmatpush.bf16.msra.mxu0 0
  %394 = vmatpush.bf16.msra.mxu0 %v196
  %395 = vmatpush.bf16.msra.mxu0 %v195
  %396 = vmatmul.bf16.gmra.mxu0 %v386
  %v397 = vpop.f32.mrf.mxu0
  %v398 = vadd.f32 0.0, %v397
  %v399 = vpop.f32.mrf.mxu0
  %400 = vdwg.mxu0
  %v401 = vadd.f32 %v380, %v398
  %v402 = vxor.u32 %v401, 2147483648
  %v403 = vmul.f32 %v402, 1.442695
  %v404 = vpow.pop %v403
  %v405 = vadd.f32 %v404, 1.0
  %v406 = vrcp.pop %v405
  %v407 = vmul.f32 %v405, %v406
  %v408 = vsub.f32 1.0, %v407
  %v409 = vmul.f32 %v406, %v408
  %v410 = vadd.f32 %v406, %v409
  %vm411 = vweird.f32 %v405
  %vm412 = vweird.f32 %v406
  %vm413 = vmor %vm411, %vm412
  %v414 = vsel %vm413, %v406, %v410
  %v415 = vand.u32 2147483647, %v405
  %vm416 = vcmp.eq.f32.partialorder %v415, 8.507059e+37
  %v417 = vand.u32 %v405, 2147483648
  %v418 = vor.u32 1.1754944e-38, %v417
  %v419 = vsel %vm416, %v418, %v414
  %v420 = vmul.f32 1.0, %v419
  %v421 = vtanh.pop %v401
  %v422 = vmul.f32 %v420, %v303
  %424 = vrot.lane.b32.xlu0 %v421, 64
  %v425 = vpop.permute.xlu0 %424
  %v427 = vmul.f32 %v420, %v425
  %429 = vrot.lane.b32.xlu0 %v427, 32
  %v430 = vpop.permute.xlu0 %429
  %v432 = vadd.f32 %v422, %v430
  %v433 = vtanh.pop %v432
  %435 = vrot.lane.b32.xlu0 %v433, 64
  %v436 = vpop.permute.xlu0 %435
  %v438 = vmul.f32 %v420, %v436
  %440 = vrot.lane.b32.xlu0 %v438, 64
  %v441 = vpop.permute.xlu0 %440
  %443 = vst.msk [vmem:[#allocation3 + $0x30] sm:$0xff] %vm314, %v441
  %v444 = vld [vmem:[#allocation2 + $0x20] sm:$0xff]
  %v445 = vpack.c.bf16 %v374, %v374
  %447 = vrot.lane.b32.xlu0 %v445, 32
  %v448 = vpop.permute.xlu0 %447
  %v450 = vsel %vm198, %v448, 0
  %452 = vmatpush.bf16.msra.mxu0 0
  %453 = vmatpush.bf16.msra.mxu0 0
  %454 = vmatpush.bf16.msra.mxu0 0
  %455 = vmatpush.bf16.msra.mxu0 0
  %456 = vmatpush.bf16.msra.mxu0 0
  %457 = vmatpush.bf16.msra.mxu0 0
  %458 = vmatpush.bf16.msra.mxu0 %v190
  %459 = vmatpush.bf16.msra.mxu0 %v189
  %460 = vmatmul.bf16.gmra.mxu0 %v450
  %v461 = vpop.f32.mrf.mxu0
  %v462 = vadd.f32 0.0, %v461
  %v463 = vpop.f32.mrf.mxu0
  %464 = vdwg.mxu0
  %v465 = vadd.f32 %v444, %v462
  %v466 = vxor.u32 %v465, 2147483648
  %v467 = vmul.f32 %v466, 1.442695
  %v468 = vpow.pop %v467
  %v469 = vadd.f32 %v468, 1.0
  %v470 = vrcp.pop %v469
  %v471 = vmul.f32 %v469, %v470
  %v472 = vsub.f32 1.0, %v471
  %v473 = vmul.f32 %v470, %v472
  %v474 = vadd.f32 %v470, %v473
  %vm475 = vweird.f32 %v469
  %vm476 = vweird.f32 %v470
  %vm477 = vmor %vm475, %vm476
  %v478 = vsel %vm477, %v470, %v474
  %v479 = vand.u32 2147483647, %v469
  %vm480 = vcmp.eq.f32.partialorder %v479, 8.507059e+37
  %v481 = vand.u32 %v469, 2147483648
  %v482 = vor.u32 1.1754944e-38, %v481
  %v483 = vsel %vm480, %v482, %v478
  %v484 = vmul.f32 1.0, %v483
  %v485 = vtanh.pop %v465
  %v486 = vmul.f32 %v484, %v368
  %488 = vrot.lane.b32.xlu0 %v485, 64
  %v489 = vpop.permute.xlu0 %488
  %v491 = vmul.f32 %v484, %v489
  %493 = vrot.lane.b32.xlu0 %v491, 32
  %v494 = vpop.permute.xlu0 %493
  %v496 = vadd.f32 %v486, %v494
  %v497 = vtanh.pop %v496
  %499 = vrot.lane.b32.xlu0 %v497, 64
  %v500 = vpop.permute.xlu0 %499
  %v502 = vmul.f32 %v484, %v500
  %504 = vrot.lane.b32.xlu0 %v502, 32
  %v505 = vpop.permute.xlu0 %504
  %507 = vst.msk [vmem:[#allocation3 + $0x10] sm:$0xff] %vm198, %v505
  %v508 = vld [vmem:[#allocation2 + $0x58] sm:$0xff]
  %v509 = vpack.c.bf16 %v438, %v438
  %511 = vrot.lane.b32.xlu0 %v509, 32
  %v512 = vpop.permute.xlu0 %511
  %v514 = vsel %vm198, %v512, 0
  %516 = vmatpush.bf16.msra.mxu0 0
  %517 = vmatpush.bf16.msra.mxu0 0
  %518 = vmatpush.bf16.msra.mxu0 0
  %519 = vmatpush.bf16.msra.mxu0 0
  %520 = vmatpush.bf16.msra.mxu0 0
  %521 = vmatpush.bf16.msra.mxu0 0
  %522 = vmatpush.bf16.msra.mxu0 %v196
  %523 = vmatpush.bf16.msra.mxu0 %v195
  %524 = vmatmul.bf16.gmra.mxu0 %v514
  %v525 = vpop.f32.mrf.mxu0
  %v526 = vadd.f32 0.0, %v525
  %v527 = vpop.f32.mrf.mxu0
  %528 = vdwg.mxu0
  %v529 = vadd.f32 %v508, %v526
  %v530 = vxor.u32 %v529, 2147483648
  %v531 = vmul.f32 %v530, 1.442695
  %v532 = vpow.pop %v531
  %v533 = vadd.f32 %v532, 1.0
  %v534 = vrcp.pop %v533
  %v535 = vmul.f32 %v533, %v534
  %v536 = vsub.f32 1.0, %v535
  %v537 = vmul.f32 %v534, %v536
  %v538 = vadd.f32 %v534, %v537
  %vm539 = vweird.f32 %v533
  %vm540 = vweird.f32 %v534
  %vm541 = vmor %vm539, %vm540
  %v542 = vsel %vm541, %v534, %v538
  %v543 = vand.u32 2147483647, %v533
  %vm544 = vcmp.eq.f32.partialorder %v543, 8.507059e+37
  %v545 = vand.u32 %v533, 2147483648
  %v546 = vor.u32 1.1754944e-38, %v545
  %v547 = vsel %vm544, %v546, %v542
  %v548 = vmul.f32 1.0, %v547
  %v549 = vtanh.pop %v529
  %v550 = vmul.f32 %v548, %v432
  %552 = vrot.lane.b32.xlu0 %v549, 64
  %v553 = vpop.permute.xlu0 %552
  %v555 = vmul.f32 %v548, %v553
  %557 = vrot.lane.b32.xlu0 %v555, 32
  %v558 = vpop.permute.xlu0 %557
  %v560 = vadd.f32 %v550, %v558
  %v561 = vtanh.pop %v560
  %563 = vrot.lane.b32.xlu0 %v561, 64
  %v564 = vpop.permute.xlu0 %563
  %v566 = vmul.f32 %v548, %v564
  %568 = vrot.lane.b32.xlu0 %v566, 64
  %v569 = vpop.permute.xlu0 %568
  %571 = vst.msk [vmem:[#allocation3 + $0x28] sm:$0xff] %vm314, %v569
  %v572 = vld [vmem:[#allocation2 + $0x30] sm:$0xff]
  %v573 = vpack.c.bf16 %v502, %v502
  %575 = vrot.lane.b32.xlu0 %v573, 32
  %v576 = vpop.permute.xlu0 %575
  %v578 = vsel %vm198, %v576, 0
  %580 = vmatpush.bf16.msra.mxu0 0
  %581 = vmatpush.bf16.msra.mxu0 0
  %582 = vmatpush.bf16.msra.mxu0 0
  %583 = vmatpush.bf16.msra.mxu0 0
  %584 = vmatpush.bf16.msra.mxu0 0
  %585 = vmatpush.bf16.msra.mxu0 0
  %586 = vmatpush.bf16.msra.mxu0 %v190
  %587 = vmatpush.bf16.msra.mxu0 %v189
  %588 = vmatmul.bf16.gmra.mxu0 %v578
  %v589 = vpop.f32.mrf.mxu0
  %v590 = vadd.f32 0.0, %v589
  %v591 = vpop.f32.mrf.mxu0
  %592 = vdwg.mxu0
  %v593 = vadd.f32 %v572, %v590
  %v594 = vxor.u32 %v593, 2147483648
  %v595 = vmul.f32 %v594, 1.442695
  %v596 = vpow.pop %v595
  %v597 = vadd.f32 %v596, 1.0
  %v598 = vrcp.pop %v597
  %v599 = vmul.f32 %v597, %v598
  %v600 = vsub.f32 1.0, %v599
  %v601 = vmul.f32 %v598, %v600
  %v602 = vadd.f32 %v598, %v601
  %vm603 = vweird.f32 %v597
  %vm604 = vweird.f32 %v598
  %vm605 = vmor %vm603, %vm604
  %v606 = vsel %vm605, %v598, %v602
  %v607 = vand.u32 2147483647, %v597
  %vm608 = vcmp.eq.f32.partialorder %v607, 8.507059e+37
  %v609 = vand.u32 %v597, 2147483648
  %v610 = vor.u32 1.1754944e-38, %v609
  %v611 = vsel %vm608, %v610, %v606
  %v612 = vmul.f32 1.0, %v611
  %v613 = vtanh.pop %v593
  %v614 = vmul.f32 %v612, %v496
  %616 = vrot.lane.b32.xlu0 %v613, 64
  %v617 = vpop.permute.xlu0 %616
  %v619 = vmul.f32 %v612, %v617
  %621 = vrot.lane.b32.xlu0 %v619, 32
  %v622 = vpop.permute.xlu0 %621
  %v624 = vadd.f32 %v614, %v622
  %v625 = vtanh.pop %v624
  %627 = vrot.lane.b32.xlu0 %v625, 64
  %v628 = vpop.permute.xlu0 %627
  %v630 = vmul.f32 %v612, %v628
  %632 = vrot.lane.b32.xlu0 %v630, 32
  %v633 = vpop.permute.xlu0 %632
  %635 = vst.msk [vmem:[#allocation3 + $0x18] sm:$0xff] %vm198, %v633
  %v636 = vld [vmem:[#allocation2 + $0x48] sm:$0xff]
  %v637 = vpack.c.bf16 %v566, %v566
  %639 = vrot.lane.b32.xlu0 %v637, 32
  %v640 = vpop.permute.xlu0 %639
  %v642 = vsel %vm198, %v640, 0
  %644 = vmatpush.bf16.msra.mxu0 0
  %645 = vmatpush.bf16.msra.mxu0 0
  %646 = vmatpush.bf16.msra.mxu0 0
  %647 = vmatpush.bf16.msra.mxu0 0
  %648 = vmatpush.bf16.msra.mxu0 0
  %649 = vmatpush.bf16.msra.mxu0 0
  %650 = vmatpush.bf16.msra.mxu0 %v196
  %651 = vmatpush.bf16.msra.mxu0 %v195
  %652 = vmatmul.bf16.gmra.mxu0 %v642
  %v653 = vpop.f32.mrf.mxu0
  %v654 = vadd.f32 0.0, %v653
  %v655 = vpop.f32.mrf.mxu0
  %656 = vdwg.mxu0
  %v657 = vadd.f32 %v636, %v654
  %v658 = vxor.u32 %v657, 2147483648
  %v659 = vmul.f32 %v658, 1.442695
  %v660 = vpow.pop %v659
  %v661 = vadd.f32 %v660, 1.0
  %v662 = vrcp.pop %v661
  %v663 = vmul.f32 %v661, %v662
  %v664 = vsub.f32 1.0, %v663
  %v665 = vmul.f32 %v662, %v664
  %v666 = vadd.f32 %v662, %v665
  %vm667 = vweird.f32 %v661
  %vm668 = vweird.f32 %v662
  %vm669 = vmor %vm667, %vm668
  %v670 = vsel %vm669, %v662, %v666
  %v671 = vand.u32 2147483647, %v661
  %vm672 = vcmp.eq.f32.partialorder %v671, 8.507059e+37
  %v673 = vand.u32 %v661, 2147483648
  %v674 = vor.u32 1.1754944e-38, %v673
  %v675 = vsel %vm672, %v674, %v670
  %v676 = vmul.f32 1.0, %v675
  %v677 = vtanh.pop %v657
  %v678 = vmul.f32 %v676, %v560
  %680 = vrot.lane.b32.xlu0 %v677, 64
  %v681 = vpop.permute.xlu0 %680
  %v683 = vmul.f32 %v676, %v681
  %685 = vrot.lane.b32.xlu0 %v683, 32
  %v686 = vpop.permute.xlu0 %685
  %v688 = vadd.f32 %v678, %v686
  %v689 = vtanh.pop %v688
  %691 = vrot.lane.b32.xlu0 %v689, 64
  %v692 = vpop.permute.xlu0 %691
  %v694 = vmul.f32 %v676, %v692
  %696 = vrot.lane.b32.xlu0 %v694, 64
  %v697 = vpop.permute.xlu0 %696
  %699 = vst.msk [vmem:[#allocation3 + $0x20] sm:$0xff] %vm314, %v697
  %v700 = vld [vmem:[#allocation2 + $0x40] sm:$0xff]
  %v701 = vpack.c.bf16 %v630, %v630
  %703 = vrot.lane.b32.xlu0 %v701, 32
  %v704 = vpop.permute.xlu0 %703
  %v706 = vsel %vm198, %v704, 0
  %708 = vmatpush.bf16.msra.mxu0 0
  %709 = vmatpush.bf16.msra.mxu0 0
  %710 = vmatpush.bf16.msra.mxu0 0
  %711 = vmatpush.bf16.msra.mxu0 0
  %712 = vmatpush.bf16.msra.mxu0 0
  %713 = vmatpush.bf16.msra.mxu0 0
  %714 = vmatpush.bf16.msra.mxu0 %v190
  %715 = vmatpush.bf16.msra.mxu0 %v189
  %716 = vmatmul.bf16.gmra.mxu0 %v706
  %v717 = vpop.f32.mrf.mxu0
  %v718 = vadd.f32 0.0, %v717
  %v719 = vpop.f32.mrf.mxu0
  %720 = vdwg.mxu0
  %v721 = vadd.f32 %v700, %v718
  %v722 = vxor.u32 %v721, 2147483648
  %v723 = vmul.f32 %v722, 1.442695
  %v724 = vpow.pop %v723
  %v725 = vadd.f32 %v724, 1.0
  %v726 = vrcp.pop %v725
  %v727 = vmul.f32 %v725, %v726
  %v728 = vsub.f32 1.0, %v727
  %v729 = vmul.f32 %v726, %v728
  %v730 = vadd.f32 %v726, %v729
  %vm731 = vweird.f32 %v725
  %vm732 = vweird.f32 %v726
  %vm733 = vmor %vm731, %vm732
  %v734 = vsel %vm733, %v726, %v730
  %v735 = vand.u32 2147483647, %v725
  %vm736 = vcmp.eq.f32.partialorder %v735, 8.507059e+37
  %v737 = vand.u32 %v725, 2147483648
  %v738 = vor.u32 1.1754944e-38, %v737
  %v739 = vsel %vm736, %v738, %v734
  %v740 = vmul.f32 1.0, %v739
  %v741 = vtanh.pop %v721
  %v742 = vmul.f32 %v740, %v624
  %744 = vrot.lane.b32.xlu0 %v741, 64
  %v745 = vpop.permute.xlu0 %744
  %v747 = vmul.f32 %v740, %v745
  %749 = vrot.lane.b32.xlu0 %v747, 32
  %v750 = vpop.permute.xlu0 %749
  %v752 = vadd.f32 %v742, %v750
  %v753 = vtanh.pop %v752
  %755 = vrot.lane.b32.xlu0 %v753, 64
  %v756 = vpop.permute.xlu0 %755
  %v758 = vmul.f32 %v740, %v756
  %760 = vrot.lane.b32.xlu0 %v758, 32
  %v761 = vpop.permute.xlu0 %760
  %763 = vst.msk [vmem:[#allocation3 + $0x20] sm:$0xff] %vm198, %v761
  %v764 = vld [vmem:[#allocation2 + $0x38] sm:$0xff]
  %v765 = vpack.c.bf16 %v694, %v694
  %767 = vrot.lane.b32.xlu0 %v765, 32
  %v768 = vpop.permute.xlu0 %767
  %v770 = vsel %vm198, %v768, 0
  %772 = vmatpush.bf16.msra.mxu0 0
  %773 = vmatpush.bf16.msra.mxu0 0
  %774 = vmatpush.bf16.msra.mxu0 0
  %775 = vmatpush.bf16.msra.mxu0 0
  %776 = vmatpush.bf16.msra.mxu0 0
  %777 = vmatpush.bf16.msra.mxu0 0
  %778 = vmatpush.bf16.msra.mxu0 %v196
  %779 = vmatpush.bf16.msra.mxu0 %v195
  %780 = vmatmul.bf16.gmra.mxu0 %v770
  %v781 = vpop.f32.mrf.mxu0
  %v782 = vadd.f32 0.0, %v781
  %v783 = vpop.f32.mrf.mxu0
  %784 = vdwg.mxu0
  %v785 = vadd.f32 %v764, %v782
  %v786 = vxor.u32 %v785, 2147483648
  %v787 = vmul.f32 %v786, 1.442695
  %v788 = vpow.pop %v787
  %v789 = vadd.f32 %v788, 1.0
  %v790 = vrcp.pop %v789
  %v791 = vmul.f32 %v789, %v790
  %v792 = vsub.f32 1.0, %v791
  %v793 = vmul.f32 %v790, %v792
  %v794 = vadd.f32 %v790, %v793
  %vm795 = vweird.f32 %v789
  %vm796 = vweird.f32 %v790
  %vm797 = vmor %vm795, %vm796
  %v798 = vsel %vm797, %v790, %v794
  %v799 = vand.u32 2147483647, %v789
  %vm800 = vcmp.eq.f32.partialorder %v799, 8.507059e+37
  %v801 = vand.u32 %v789, 2147483648
  %v802 = vor.u32 1.1754944e-38, %v801
  %v803 = vsel %vm800, %v802, %v798
  %v804 = vmul.f32 1.0, %v803
  %v805 = vtanh.pop %v785
  %v806 = vmul.f32 %v804, %v688
  %808 = vrot.lane.b32.xlu0 %v805, 64
  %v809 = vpop.permute.xlu0 %808
  %v811 = vmul.f32 %v804, %v809
  %813 = vrot.lane.b32.xlu0 %v811, 32
  %v814 = vpop.permute.xlu0 %813
  %v816 = vadd.f32 %v806, %v814
  %v817 = vtanh.pop %v816
  %819 = vrot.lane.b32.xlu0 %v817, 64
  %v820 = vpop.permute.xlu0 %819
  %v822 = vmul.f32 %v804, %v820
  %824 = vrot.lane.b32.xlu0 %v822, 64
  %v825 = vpop.permute.xlu0 %824
  %827 = vst.msk [vmem:[#allocation3 + $0x18] sm:$0xff] %vm314, %v825
  %v828 = vld [vmem:[#allocation2 + $0x50] sm:$0xff]
  %v829 = vpack.c.bf16 %v758, %v758
  %831 = vrot.lane.b32.xlu0 %v829, 32
  %v832 = vpop.permute.xlu0 %831
  %v834 = vsel %vm198, %v832, 0
  %836 = vmatpush.bf16.msra.mxu0 0
  %837 = vmatpush.bf16.msra.mxu0 0
  %838 = vmatpush.bf16.msra.mxu0 0
  %839 = vmatpush.bf16.msra.mxu0 0
  %840 = vmatpush.bf16.msra.mxu0 0
  %841 = vmatpush.bf16.msra.mxu0 0
  %842 = vmatpush.bf16.msra.mxu0 %v190
  %843 = vmatpush.bf16.msra.mxu0 %v189
  %844 = vmatmul.bf16.gmra.mxu0 %v834
  %v845 = vpop.f32.mrf.mxu0
  %v846 = vadd.f32 0.0, %v845
  %v847 = vpop.f32.mrf.mxu0
  %848 = vdwg.mxu0
  %v849 = vadd.f32 %v828, %v846
  %v850 = vxor.u32 %v849, 2147483648
  %v851 = vmul.f32 %v850, 1.442695
  %v852 = vpow.pop %v851
  %v853 = vadd.f32 %v852, 1.0
  %v854 = vrcp.pop %v853
  %v855 = vmul.f32 %v853, %v854
  %v856 = vsub.f32 1.0, %v855
  %v857 = vmul.f32 %v854, %v856
  %v858 = vadd.f32 %v854, %v857
  %vm859 = vweird.f32 %v853
  %vm860 = vweird.f32 %v854
  %vm861 = vmor %vm859, %vm860
  %v862 = vsel %vm861, %v854, %v858
  %v863 = vand.u32 2147483647, %v853
  %vm864 = vcmp.eq.f32.partialorder %v863, 8.507059e+37
  %v865 = vand.u32 %v853, 2147483648
  %v866 = vor.u32 1.1754944e-38, %v865
  %v867 = vsel %vm864, %v866, %v862
  %v868 = vmul.f32 1.0, %v867
  %v869 = vtanh.pop %v849
  %v870 = vmul.f32 %v868, %v752
  %872 = vrot.lane.b32.xlu0 %v869, 64
  %v873 = vpop.permute.xlu0 %872
  %v875 = vmul.f32 %v868, %v873
  %877 = vrot.lane.b32.xlu0 %v875, 32
  %v878 = vpop.permute.xlu0 %877
  %v880 = vadd.f32 %v870, %v878
  %v881 = vtanh.pop %v880
  %883 = vrot.lane.b32.xlu0 %v881, 64
  %v884 = vpop.permute.xlu0 %883
  %v886 = vmul.f32 %v868, %v884
  %888 = vrot.lane.b32.xlu0 %v886, 32
  %v889 = vpop.permute.xlu0 %888
  %891 = vst.msk [vmem:[#allocation3 + $0x28] sm:$0xff] %vm198, %v889
  %v892 = vld [vmem:[#allocation2 + $0x28] sm:$0xff]
  %v893 = vpack.c.bf16 %v822, %v822
  %895 = vrot.lane.b32.xlu0 %v893, 32
  %v896 = vpop.permute.xlu0 %895
  %v898 = vsel %vm198, %v896, 0
  %900 = vmatpush.bf16.msra.mxu0 0
  %901 = vmatpush.bf16.msra.mxu0 0
  %902 = vmatpush.bf16.msra.mxu0 0
  %903 = vmatpush.bf16.msra.mxu0 0
  %904 = vmatpush.bf16.msra.mxu0 0
  %905 = vmatpush.bf16.msra.mxu0 0
  %906 = vmatpush.bf16.msra.mxu0 %v196
  %907 = vmatpush.bf16.msra.mxu0 %v195
  %908 = vmatmul.bf16.gmra.mxu0 %v898
  %v909 = vpop.f32.mrf.mxu0
  %v910 = vadd.f32 0.0, %v909
  %v911 = vpop.f32.mrf.mxu0
  %912 = vdwg.mxu0
  %v913 = vadd.f32 %v892, %v910
  %v914 = vxor.u32 %v913, 2147483648
  %v915 = vmul.f32 %v914, 1.442695
  %v916 = vpow.pop %v915
  %v917 = vadd.f32 %v916, 1.0
  %v918 = vrcp.pop %v917
  %v919 = vmul.f32 %v917, %v918
  %v920 = vsub.f32 1.0, %v919
  %v921 = vmul.f32 %v918, %v920
  %v922 = vadd.f32 %v918, %v921
  %vm923 = vweird.f32 %v917
  %vm924 = vweird.f32 %v918
  %vm925 = vmor %vm923, %vm924
  %v926 = vsel %vm925, %v918, %v922
  %v927 = vand.u32 2147483647, %v917
  %vm928 = vcmp.eq.f32.partialorder %v927, 8.507059e+37
  %v929 = vand.u32 %v917, 2147483648
  %v930 = vor.u32 1.1754944e-38, %v929
  %v931 = vsel %vm928, %v930, %v926
  %v932 = vmul.f32 1.0, %v931
  %v933 = vtanh.pop %v913
  %v934 = vmul.f32 %v932, %v816
  %936 = vrot.lane.b32.xlu0 %v933, 64
  %v937 = vpop.permute.xlu0 %936
  %v939 = vmul.f32 %v932, %v937
  %941 = vrot.lane.b32.xlu0 %v939, 32
  %v942 = vpop.permute.xlu0 %941
  %v944 = vadd.f32 %v934, %v942
  %v945 = vtanh.pop %v944
  %947 = vrot.lane.b32.xlu0 %v945, 64
  %v948 = vpop.permute.xlu0 %947
  %v950 = vmul.f32 %v932, %v948
  %952 = vrot.lane.b32.xlu0 %v950, 64
  %v953 = vpop.permute.xlu0 %952
  %955 = vst.msk [vmem:[#allocation3 + $0x10] sm:$0xff] %vm314, %v953
  %v956 = vld [vmem:[#allocation2 + $0x60] sm:$0xff]
  %v957 = vpack.c.bf16 %v886, %v886
  %959 = vrot.lane.b32.xlu0 %v957, 32
  %v960 = vpop.permute.xlu0 %959
  %v962 = vsel %vm198, %v960, 0
  %964 = vmatpush.bf16.msra.mxu0 0
  %965 = vmatpush.bf16.msra.mxu0 0
  %966 = vmatpush.bf16.msra.mxu0 0
  %967 = vmatpush.bf16.msra.mxu0 0
  %968 = vmatpush.bf16.msra.mxu0 0
  %969 = vmatpush.bf16.msra.mxu0 0
  %970 = vmatpush.bf16.msra.mxu0 %v190
  %971 = vmatpush.bf16.msra.mxu0 %v189
  %972 = vmatmul.bf16.gmra.mxu0 %v962
  %v973 = vpop.f32.mrf.mxu0
  %v974 = vadd.f32 0.0, %v973
  %v975 = vpop.f32.mrf.mxu0
  %976 = vdwg.mxu0
  %v977 = vadd.f32 %v956, %v974
  %v978 = vxor.u32 %v977, 2147483648
  %v979 = vmul.f32 %v978, 1.442695
  %v980 = vpow.pop %v979
  %v981 = vadd.f32 %v980, 1.0
  %v982 = vrcp.pop %v981
  %v983 = vmul.f32 %v981, %v982
  %v984 = vsub.f32 1.0, %v983
  %v985 = vmul.f32 %v982, %v984
  %v986 = vadd.f32 %v982, %v985
  %vm987 = vweird.f32 %v981
  %vm988 = vweird.f32 %v982
  %vm989 = vmor %vm987, %vm988
  %v990 = vsel %vm989, %v982, %v986
  %v991 = vand.u32 2147483647, %v981
  %vm992 = vcmp.eq.f32.partialorder %v991, 8.507059e+37
  %v993 = vand.u32 %v981, 2147483648
  %v994 = vor.u32 1.1754944e-38, %v993
  %v995 = vsel %vm992, %v994, %v990
  %v996 = vmul.f32 1.0, %v995
  %v997 = vtanh.pop %v977
  %v998 = vmul.f32 %v996, %v880
  %1000 = vrot.lane.b32.xlu0 %v997, 64
  %v1001 = vpop.permute.xlu0 %1000
  %v1003 = vmul.f32 %v996, %v1001
  %1005 = vrot.lane.b32.xlu0 %v1003, 32
  %v1006 = vpop.permute.xlu0 %1005
  %v1008 = vadd.f32 %v998, %v1006
  %v1009 = vtanh.pop %v1008
  %1011 = vrot.lane.b32.xlu0 %v1009, 64
  %v1012 = vpop.permute.xlu0 %1011
  %v1014 = vmul.f32 %v996, %v1012
  %1016 = vrot.lane.b32.xlu0 %v1014, 32
  %v1017 = vpop.permute.xlu0 %1016
  %1019 = vst.msk [vmem:[#allocation3 + $0x30] sm:$0xff] %vm198, %v1017
  %v1020 = vld [vmem:[#allocation2 + $0x18] sm:$0xff]
  %v1021 = vpack.c.bf16 %v950, %v950
  %1023 = vrot.lane.b32.xlu0 %v1021, 32
  %v1024 = vpop.permute.xlu0 %1023
  %v1026 = vsel %vm198, %v1024, 0
  %1028 = vmatpush.bf16.msra.mxu0 0
  %1029 = vmatpush.bf16.msra.mxu0 0
  %1030 = vmatpush.bf16.msra.mxu0 0
  %1031 = vmatpush.bf16.msra.mxu0 0
  %1032 = vmatpush.bf16.msra.mxu0 0
  %1033 = vmatpush.bf16.msra.mxu0 0
  %1034 = vmatpush.bf16.msra.mxu0 %v196
  %1035 = vmatpush.bf16.msra.mxu0 %v195
  %1036 = vmatmul.bf16.gmra.mxu0 %v1026
  %v1037 = vpop.f32.mrf.mxu0
  %v1038 = vadd.f32 0.0, %v1037
  %v1039 = vpop.f32.mrf.mxu0
  %1040 = vdwg.mxu0
  %v1041 = vadd.f32 %v1020, %v1038
  %v1042 = vxor.u32 %v1041, 2147483648
  %v1043 = vmul.f32 %v1042, 1.442695
  %v1044 = vpow.pop %v1043
  %v1045 = vadd.f32 %v1044, 1.0
  %v1046 = vrcp.pop %v1045
  %v1047 = vmul.f32 %v1045, %v1046
  %v1048 = vsub.f32 1.0, %v1047
  %v1049 = vmul.f32 %v1046, %v1048
  %v1050 = vadd.f32 %v1046, %v1049
  %vm1051 = vweird.f32 %v1045
  %vm1052 = vweird.f32 %v1046
  %vm1053 = vmor %vm1051, %vm1052
  %v1054 = vsel %vm1053, %v1046, %v1050
  %v1055 = vand.u32 2147483647, %v1045
  %vm1056 = vcmp.eq.f32.partialorder %v1055, 8.507059e+37
  %v1057 = vand.u32 %v1045, 2147483648
  %v1058 = vor.u32 1.1754944e-38, %v1057
  %v1059 = vsel %vm1056, %v1058, %v1054
  %v1060 = vmul.f32 1.0, %v1059
  %v1061 = vtanh.pop %v1041
  %v1062 = vmul.f32 %v1060, %v944
  %1064 = vrot.lane.b32.xlu0 %v1061, 64
  %v1065 = vpop.permute.xlu0 %1064
  %v1067 = vmul.f32 %v1060, %v1065
  %1069 = vrot.lane.b32.xlu0 %v1067, 32
  %v1070 = vpop.permute.xlu0 %1069
  %v1072 = vadd.f32 %v1062, %v1070
  %v1073 = vtanh.pop %v1072
  %1075 = vrot.lane.b32.xlu0 %v1073, 64
  %v1076 = vpop.permute.xlu0 %1075
  %v1078 = vmul.f32 %v1060, %v1076
  %1080 = vrot.lane.b32.xlu0 %v1078, 64
  %v1081 = vpop.permute.xlu0 %1080
  %1083 = vst.msk [vmem:[#allocation3 + $0x8] sm:$0xff] %vm314, %v1081
  %v1084 = vld [vmem:[#allocation2 + $0x70] sm:$0xff]
  %v1085 = vpack.c.bf16 %v1014, %v1014
  %1087 = vrot.lane.b32.xlu0 %v1085, 32
  %v1088 = vpop.permute.xlu0 %1087
  %v1090 = vsel %vm198, %v1088, 0
  %1092 = vmatpush.bf16.msra.mxu0 0
  %1093 = vmatpush.bf16.msra.mxu0 0
  %1094 = vmatpush.bf16.msra.mxu0 0
  %1095 = vmatpush.bf16.msra.mxu0 0
  %1096 = vmatpush.bf16.msra.mxu0 0
  %1097 = vmatpush.bf16.msra.mxu0 0
  %1098 = vmatpush.bf16.msra.mxu0 %v190
  %1099 = vmatpush.bf16.msra.mxu0 %v189
  %1100 = vmatmul.bf16.gmra.mxu0 %v1090
  %v1101 = vpop.f32.mrf.mxu0
  %v1102 = vadd.f32 0.0, %v1101
  %v1103 = vpop.f32.mrf.mxu0
  %1104 = vdwg.mxu0
  %v1105 = vadd.f32 %v1084, %v1102
  %v1106 = vxor.u32 %v1105, 2147483648
  %v1107 = vmul.f32 %v1106, 1.442695
  %v1108 = vpow.pop %v1107
  %v1109 = vadd.f32 %v1108, 1.0
  %v1110 = vrcp.pop %v1109
  %v1111 = vmul.f32 %v1109, %v1110
  %v1112 = vsub.f32 1.0, %v1111
  %v1113 = vmul.f32 %v1110, %v1112
  %v1114 = vadd.f32 %v1110, %v1113
  %vm1115 = vweird.f32 %v1109
  %vm1116 = vweird.f32 %v1110
  %vm1117 = vmor %vm1115, %vm1116
  %v1118 = vsel %vm1117, %v1110, %v1114
  %v1119 = vand.u32 2147483647, %v1109
  %vm1120 = vcmp.eq.f32.partialorder %v1119, 8.507059e+37
  %v1121 = vand.u32 %v1109, 2147483648
  %v1122 = vor.u32 1.1754944e-38, %v1121
  %v1123 = vsel %vm1120, %v1122, %v1118
  %v1124 = vmul.f32 1.0, %v1123
  %v1125 = vtanh.pop %v1105
  %v1126 = vmul.f32 %v1124, %v1008
  %1128 = vrot.lane.b32.xlu0 %v1125, 64
  %v1129 = vpop.permute.xlu0 %1128
  %v1131 = vmul.f32 %v1124, %v1129
  %1133 = vrot.lane.b32.xlu0 %v1131, 32
  %v1134 = vpop.permute.xlu0 %1133
  %v1136 = vadd.f32 %v1126, %v1134
  %v1137 = vtanh.pop %v1136
  %1139 = vrot.lane.b32.xlu0 %v1137, 64
  %v1140 = vpop.permute.xlu0 %1139
  %v1142 = vmul.f32 %v1124, %v1140
  %1144 = vrot.lane.b32.xlu0 %v1142, 32
  %v1145 = vpop.permute.xlu0 %1144
  %1147 = vst.msk [vmem:[#allocation3 + $0x38] sm:$0xff] %vm198, %v1145
  %v1148 = vld [vmem:[#allocation2 + $0x8] sm:$0xff]
  %v1149 = vpack.c.bf16 %v1078, %v1078
  %1151 = vrot.lane.b32.xlu0 %v1149, 32
  %v1152 = vpop.permute.xlu0 %1151
  %v1154 = vsel %vm198, %v1152, 0
  %1156 = vmatpush.bf16.msra.mxu0 0
  %1157 = vmatpush.bf16.msra.mxu0 0
  %1158 = vmatpush.bf16.msra.mxu0 0
  %1159 = vmatpush.bf16.msra.mxu0 0
  %1160 = vmatpush.bf16.msra.mxu0 0
  %1161 = vmatpush.bf16.msra.mxu0 0
  %1162 = vmatpush.bf16.msra.mxu0 %v196
  %1163 = vmatpush.bf16.msra.mxu0 %v195
  %1164 = vmatmul.bf16.gmra.mxu0 %v1154
  %v1165 = vpop.f32.mrf.mxu0
  %v1166 = vadd.f32 0.0, %v1165
  %v1167 = vpop.f32.mrf.mxu0
  %1168 = vdwg.mxu0
  %v1169 = vadd.f32 %v1148, %v1166
  %v1170 = vxor.u32 %v1169, 2147483648
  %v1171 = vmul.f32 %v1170, 1.442695
  %v1172 = vpow.pop %v1171
  %v1173 = vadd.f32 %v1172, 1.0
  %v1174 = vrcp.pop %v1173
  %v1175 = vmul.f32 %v1173, %v1174
  %v1176 = vsub.f32 1.0, %v1175
  %v1177 = vmul.f32 %v1174, %v1176
  %v1178 = vadd.f32 %v1174, %v1177
  %vm1179 = vweird.f32 %v1173
  %vm1180 = vweird.f32 %v1174
  %vm1181 = vmor %vm1179, %vm1180
  %v1182 = vsel %vm1181, %v1174, %v1178
  %v1183 = vand.u32 2147483647, %v1173
  %vm1184 = vcmp.eq.f32.partialorder %v1183, 8.507059e+37
  %v1185 = vand.u32 %v1173, 2147483648
  %v1186 = vor.u32 1.1754944e-38, %v1185
  %v1187 = vsel %vm1184, %v1186, %v1182
  %v1188 = vmul.f32 1.0, %v1187
  %v1189 = vtanh.pop %v1169
  %v1190 = vmul.f32 %v1188, %v1072
  %1192 = vrot.lane.b32.xlu0 %v1189, 64
  %v1193 = vpop.permute.xlu0 %1192
  %v1195 = vmul.f32 %v1188, %v1193
  %1197 = vrot.lane.b32.xlu0 %v1195, 32
  %v1198 = vpop.permute.xlu0 %1197
  %v1200 = vadd.f32 %v1190, %v1198
  %v1201 = vtanh.pop %v1200
  %1203 = vrot.lane.b32.xlu0 %v1201, 64
  %v1204 = vpop.permute.xlu0 %1203
  %v1206 = vmul.f32 %v1188, %v1204
  %1208 = vrot.lane.b32.xlu0 %v1206, 64
  %v1209 = vpop.permute.xlu0 %1208
  %1211 = vst.msk [vmem:[#allocation3] sm:$0xff] %vm314, %v1209
  %v1212 = vld [vmem:[#allocation3] sm:$0xff]
  %v1213 = vld [vmem:[#allocation3 + $0x8] sm:$0xff]
  %v1214 = vld [vmem:[#allocation3 + $0x10] sm:$0xff]
  %v1215 = vld [vmem:[#allocation3 + $0x18] sm:$0xff]
  %v1216 = vld [vmem:[#allocation3 + $0x20] sm:$0xff]
  %v1217 = vld [vmem:[#allocation3 + $0x28] sm:$0xff]
  %v1218 = vld [vmem:[#allocation3 + $0x30] sm:$0xff]
  %v1219 = vld [vmem:[#allocation3 + $0x38] sm:$0xff]
  %v1220 = vld [vmem:[%s4] sm:$0xff]
  %v1221 = vld [vmem:[%s4 + $0x8] sm:$0xff]
  %v1222 = vld [vmem:[%s4 + $0x10] sm:$0xff]
  %v1223 = vld [vmem:[%s4 + $0x18] sm:$0xff]
  %v1224 = vld [vmem:[%s4 + $0x20] sm:$0xff]
  %v1225 = vld [vmem:[%s4 + $0x28] sm:$0xff]
  %v1226 = vld [vmem:[%s4 + $0x30] sm:$0xff]
  %v1227 = vld [vmem:[%s4 + $0x38] sm:$0xff]
  %v1228 = vld [vmem:[%s4 + $0x40] sm:$0xff]
  %v1229 = vld [vmem:[%s4 + $0x48] sm:$0xff]
  %v1230 = vld [vmem:[%s4 + $0x50] sm:$0xff]
  %v1231 = vld [vmem:[%s4 + $0x58] sm:$0xff]
  %v1232 = vld [vmem:[%s4 + $0x60] sm:$0xff]
  %v1233 = vld [vmem:[%s4 + $0x68] sm:$0xff]
  %v1234 = vld [vmem:[%s4 + $0x70] sm:$0xff]
  %v1235 = vld [vmem:[%s4 + $0x78] sm:$0xff]
  %v1236 = vld [vmem:[%s6] sm:$0x3]
  %v1238 = vperm.slane %v1236, 0
  %v1239 = vperm.slane %v1236, 1
  %vm1242 = vcmask 523264
  %v1244 = vsel %vm1242, %v1212, 0
  %v1247 = vsel %vm1242, %v1213, 0
  %v1250 = vsel %vm1242, %v1214, 0
  %v1253 = vsel %vm1242, %v1215, 0
  %v1256 = vsel %vm1242, %v1216, 0
  %v1259 = vsel %vm1242, %v1217, 0
  %v1262 = vsel %vm1242, %v1218, 0
  %v1265 = vsel %vm1242, %v1219, 0
  %1267 = vmatpush.msra.mxu0 0.0
  %1268 = vmatpush.msra.mxu0 0.0
  %1269 = vmatpush.msra.mxu0 0.0
  %1270 = vmatpush.msra.mxu0 0.0
  %1271 = vmatpush.msra.mxu0 0.0
  %1272 = vmatpush.msra.mxu0 0.0
  %1273 = vmatpush.msra.mxu0 0.0
  %1274 = vmatpush.msra.mxu0 0.0
  %1275 = vmatpush.msra.mxu0 %v1234
  %1276 = vmatpush.msra.mxu0 %v1232
  %1277 = vmatpush.msra.mxu0 %v1230
  %1278 = vmatpush.msra.mxu0 %v1228
  %1279 = vmatpush.msra.mxu0 %v1226
  %1280 = vmatpush.msra.mxu0 %v1224
  %1281 = vmatpush.msra.mxu0 %v1222
  %1282 = vmatpush.msra.mxu0 %v1220
  %1283 = vmatmul.f32.gmra.mxu0 %v1244
  %v1284 = vpop.f32.mrf.mxu0
  %v1285 = vadd.f32 %v1238, %v1284
  %1286 = vmatmul.f32.gmra.mxu0 %v1247
  %v1287 = vpop.f32.mrf.mxu0
  %v1288 = vadd.f32 %v1238, %v1287
  %1289 = vmatmul.f32.gmra.mxu0 %v1250
  %v1290 = vpop.f32.mrf.mxu0
  %v1291 = vadd.f32 %v1238, %v1290
  %1292 = vmatmul.f32.gmra.mxu0 %v1253
  %v1293 = vpop.f32.mrf.mxu0
  %v1294 = vadd.f32 %v1238, %v1293
  %1295 = vmatmul.f32.gmra.mxu0 %v1256
  %v1296 = vpop.f32.mrf.mxu0
  %v1297 = vadd.f32 %v1238, %v1296
  %1298 = vmatmul.f32.gmra.mxu0 %v1259
  %v1299 = vpop.f32.mrf.mxu0
  %v1300 = vadd.f32 %v1238, %v1299
  %1301 = vmatmul.f32.gmra.mxu0 %v1262
  %v1302 = vpop.f32.mrf.mxu0
  %v1303 = vadd.f32 %v1238, %v1302
  %1304 = vmatmul.f32.gmra.mxu0 %v1265
  %v1305 = vpop.f32.mrf.mxu0
  %v1306 = vadd.f32 %v1238, %v1305
  %1307 = vdwg.mxu0
  %1308 = vmatpush.msra.mxu0 0.0
  %1309 = vmatpush.msra.mxu0 0.0
  %1310 = vmatpush.msra.mxu0 0.0
  %1311 = vmatpush.msra.mxu0 0.0
  %1312 = vmatpush.msra.mxu0 0.0
  %1313 = vmatpush.msra.mxu0 0.0
  %1314 = vmatpush.msra.mxu0 0.0
  %1315 = vmatpush.msra.mxu0 0.0
  %1316 = vmatpush.msra.mxu0 %v1235
  %1317 = vmatpush.msra.mxu0 %v1233
  %1318 = vmatpush.msra.mxu0 %v1231
  %1319 = vmatpush.msra.mxu0 %v1229
  %1320 = vmatpush.msra.mxu0 %v1227
  %1321 = vmatpush.msra.mxu0 %v1225
  %1322 = vmatpush.msra.mxu0 %v1223
  %1323 = vmatpush.msra.mxu0 %v1221
  %1324 = vmatmul.f32.gmra.mxu0 %v1244
  %v1325 = vpop.f32.mrf.mxu0
  %v1326 = vadd.f32 %v1239, %v1325
  %1327 = vmatmul.f32.gmra.mxu0 %v1247
  %v1328 = vpop.f32.mrf.mxu0
  %v1329 = vadd.f32 %v1239, %v1328
  %1330 = vmatmul.f32.gmra.mxu0 %v1250
  %v1331 = vpop.f32.mrf.mxu0
  %v1332 = vadd.f32 %v1239, %v1331
  %1333 = vmatmul.f32.gmra.mxu0 %v1253
  %v1334 = vpop.f32.mrf.mxu0
  %v1335 = vadd.f32 %v1239, %v1334
  %1336 = vmatmul.f32.gmra.mxu0 %v1256
  %v1337 = vpop.f32.mrf.mxu0
  %v1338 = vadd.f32 %v1239, %v1337
  %1339 = vmatmul.f32.gmra.mxu0 %v1259
  %v1340 = vpop.f32.mrf.mxu0
  %v1341 = vadd.f32 %v1239, %v1340
  %1342 = vmatmul.f32.gmra.mxu0 %v1262
  %v1343 = vpop.f32.mrf.mxu0
  %v1344 = vadd.f32 %v1239, %v1343
  %1345 = vmatmul.f32.gmra.mxu0 %v1265
  %v1346 = vpop.f32.mrf.mxu0
  %v1347 = vadd.f32 %v1239, %v1346
  %1348 = vdwg.mxu0
  %1349 = vst [vmem:[#allocation2] sm:$0xff] %v1285
  %1350 = vst [vmem:[#allocation2 + $0x8] sm:$0xff] %v1326
  %1351 = vst [vmem:[#allocation2 + $0x10] sm:$0xff] %v1288
  %1352 = vst [vmem:[#allocation2 + $0x18] sm:$0xff] %v1329
  %1353 = vst [vmem:[#allocation2 + $0x20] sm:$0xff] %v1291
  %1354 = vst [vmem:[#allocation2 + $0x28] sm:$0xff] %v1332
  %1355 = vst [vmem:[#allocation2 + $0x30] sm:$0xff] %v1294
  %1356 = vst [vmem:[#allocation2 + $0x38] sm:$0xff] %v1335
  %1357 = vst [vmem:[#allocation2 + $0x40] sm:$0xff] %v1297
  %1358 = vst [vmem:[#allocation2 + $0x48] sm:$0xff] %v1338
  %1359 = vst [vmem:[#allocation2 + $0x50] sm:$0xff] %v1300
  %1360 = vst [vmem:[#allocation2 + $0x58] sm:$0xff] %v1341
  %1361 = vst [vmem:[#allocation2 + $0x60] sm:$0xff] %v1303
  %1362 = vst [vmem:[#allocation2 + $0x68] sm:$0xff] %v1344
  %1363 = vst [vmem:[#allocation2 + $0x70] sm:$0xff] %v1306
  %1364 = vst [vmem:[#allocation2 + $0x78] sm:$0xff] %v1347
  %v1365 = vld [vmem:[%s5] sm:$0xff]
  %v1366 = vld [vmem:[%s5 + $0x8] sm:$0xff]
  %v1367 = vld [vmem:[%s5 + $0x10] sm:$0xff]
  %v1368 = vld [vmem:[%s5 + $0x18] sm:$0xff]
  %v1369 = vpack.c.bf16 %v1366, %v1365
  %v1370 = vpack.c.bf16 %v1368, %v1367
  %v1371 = vld [vmem:[#allocation2 + $0x78] sm:$0xff]
  %v1372 = vxor.u32 %v1371, 2147483648
  %v1373 = vmul.f32 %v1372, 1.442695
  %v1374 = vpow.pop %v1373
  %v1375 = vadd.f32 %v1374, 1.0
  %v1376 = vrcp.pop %v1375
  %v1377 = vmul.f32 %v1375, %v1376
  %v1378 = vsub.f32 1.0, %v1377
  %v1379 = vmul.f32 %v1376, %v1378
  %v1380 = vadd.f32 %v1376, %v1379
  %vm1381 = vweird.f32 %v1375
  %vm1382 = vweird.f32 %v1376
  %vm1383 = vmor %vm1381, %vm1382
  %v1384 = vsel %vm1383, %v1376, %v1380
  %v1385 = vand.u32 2147483647, %v1375
  %vm1386 = vcmp.eq.f32.partialorder %v1385, 8.507059e+37
  %v1387 = vand.u32 %v1375, 2147483648
  %v1388 = vor.u32 1.1754944e-38, %v1387
  %v1389 = vsel %vm1386, %v1388, %v1384
  %v1390 = vmul.f32 1.0, %v1389
  %v1391 = vtanh.pop %v1371
  %1393 = vrot.lane.b32.xlu0 %v1391, 64
  %v1394 = vpop.permute.xlu0 %1393
  %v1396 = vmul.f32 %v1390, %v1394
  %v1397 = vtanh.pop %v1396
  %1399 = vrot.lane.b32.xlu0 %v1397, 96
  %v1400 = vpop.permute.xlu0 %1399
  %v1402 = vmul.f32 %v1390, %v1400
  %v1403 = vld [vmem:[#allocation2] sm:$0xff]
  %1404 = vmatpush.bf16.msra.mxu0 0
  %1405 = vmatpush.bf16.msra.mxu0 0
  %1406 = vmatpush.bf16.msra.mxu0 0
  %1407 = vmatpush.bf16.msra.mxu0 0
  %1408 = vmatpush.bf16.msra.mxu0 0
  %1409 = vmatpush.bf16.msra.mxu0 0
  %1410 = vmatpush.bf16.msra.mxu0 %v1370
  %1411 = vmatpush.bf16.msra.mxu0 %v1369
  %1412 = vmatmul.bf16.gmra.mxu0 %v200
  %v1413 = vpop.f32.mrf.mxu0
  %v1414 = vadd.f32 0.0, %v1413
  %v1415 = vpop.f32.mrf.mxu0
  %1416 = vdwg.mxu0
  %v1417 = vadd.f32 %v1403, %v1414
  %v1418 = vxor.u32 %v1417, 2147483648
  %v1419 = vmul.f32 %v1418, 1.442695
  %v1420 = vpow.pop %v1419
  %v1421 = vadd.f32 %v1420, 1.0
  %v1422 = vrcp.pop %v1421
  %v1423 = vmul.f32 %v1421, %v1422
  %v1424 = vsub.f32 1.0, %v1423
  %v1425 = vmul.f32 %v1422, %v1424
  %v1426 = vadd.f32 %v1422, %v1425
  %vm1427 = vweird.f32 %v1421
  %vm1428 = vweird.f32 %v1422
  %vm1429 = vmor %vm1427, %vm1428
  %v1430 = vsel %vm1429, %v1422, %v1426
  %v1431 = vand.u32 2147483647, %v1421
  %vm1432 = vcmp.eq.f32.partialorder %v1431, 8.507059e+37
  %v1433 = vand.u32 %v1421, 2147483648
  %v1434 = vor.u32 1.1754944e-38, %v1433
  %v1435 = vsel %vm1432, %v1434, %v1430
  %v1436 = vmul.f32 1.0, %v1435
  %v1437 = vtanh.pop %v1417
  %v1438 = vmul.f32 %v1436, 0.0
  %1440 = vrot.lane.b32.xlu0 %v1437, 64
  %v1441 = vpop.permute.xlu0 %1440
  %v1443 = vmul.f32 %v1436, %v1441
  %1445 = vrot.lane.b32.xlu0 %v1443, 32
  %v1446 = vpop.permute.xlu0 %1445
  %v1448 = vadd.f32 %v1438, %v1446
  %v1449 = vtanh.pop %v1448
  %1451 = vrot.lane.b32.xlu0 %v1449, 64
  %v1452 = vpop.permute.xlu0 %1451
  %v1454 = vmul.f32 %v1436, %v1452
  %v1455 = vld [vmem:[#allocation2 + $0x10] sm:$0xff]
  %v1456 = vpack.c.bf16 %v1454, %v1454
  %1458 = vrot.lane.b32.xlu0 %v1456, 32
  %v1459 = vpop.permute.xlu0 %1458
  %v1461 = vsel %vm198, %v1459, 0
  %1463 = vmatpush.bf16.msra.mxu0 0
  %1464 = vmatpush.bf16.msra.mxu0 0
  %1465 = vmatpush.bf16.msra.mxu0 0
  %1466 = vmatpush.bf16.msra.mxu0 0
  %1467 = vmatpush.bf16.msra.mxu0 0
  %1468 = vmatpush.bf16.msra.mxu0 0
  %1469 = vmatpush.bf16.msra.mxu0 %v1370
  %1470 = vmatpush.bf16.msra.mxu0 %v1369
  %1471 = vmatmul.bf16.gmra.mxu0 %v1461
  %v1472 = vpop.f32.mrf.mxu0
  %v1473 = vadd.f32 0.0, %v1472
  %v1474 = vpop.f32.mrf.mxu0
  %1475 = vdwg.mxu0
  %v1476 = vadd.f32 %v1455, %v1473
  %v1477 = vxor.u32 %v1476, 2147483648
  %v1478 = vmul.f32 %v1477, 1.442695
  %v1479 = vpow.pop %v1478
  %v1480 = vadd.f32 %v1479, 1.0
  %v1481 = vrcp.pop %v1480
  %v1482 = vmul.f32 %v1480, %v1481
  %v1483 = vsub.f32 1.0, %v1482
  %v1484 = vmul.f32 %v1481, %v1483
  %v1485 = vadd.f32 %v1481, %v1484
  %vm1486 = vweird.f32 %v1480
  %vm1487 = vweird.f32 %v1481
  %vm1488 = vmor %vm1486, %vm1487
  %v1489 = vsel %vm1488, %v1481, %v1485
  %v1490 = vand.u32 2147483647, %v1480
  %vm1491 = vcmp.eq.f32.partialorder %v1490, 8.507059e+37
  %v1492 = vand.u32 %v1480, 2147483648
  %v1493 = vor.u32 1.1754944e-38, %v1492
  %v1494 = vsel %vm1491, %v1493, %v1489
  %v1495 = vmul.f32 1.0, %v1494
  %v1496 = vtanh.pop %v1476
  %v1497 = vmul.f32 %v1495, %v1448
  %1499 = vrot.lane.b32.xlu0 %v1496, 64
  %v1500 = vpop.permute.xlu0 %1499
  %v1502 = vmul.f32 %v1495, %v1500
  %1504 = vrot.lane.b32.xlu0 %v1502, 32
  %v1505 = vpop.permute.xlu0 %1504
  %v1507 = vadd.f32 %v1497, %v1505
  %v1508 = vtanh.pop %v1507
  %1510 = vrot.lane.b32.xlu0 %v1508, 64
  %v1511 = vpop.permute.xlu0 %1510
  %v1513 = vmul.f32 %v1495, %v1511
  %v1514 = vld [vmem:[#allocation2 + $0x20] sm:$0xff]
  %v1515 = vpack.c.bf16 %v1513, %v1513
  %1517 = vrot.lane.b32.xlu0 %v1515, 32
  %v1518 = vpop.permute.xlu0 %1517
  %v1520 = vsel %vm198, %v1518, 0
  %1522 = vmatpush.bf16.msra.mxu0 0
  %1523 = vmatpush.bf16.msra.mxu0 0
  %1524 = vmatpush.bf16.msra.mxu0 0
  %1525 = vmatpush.bf16.msra.mxu0 0
  %1526 = vmatpush.bf16.msra.mxu0 0
  %1527 = vmatpush.bf16.msra.mxu0 0
  %1528 = vmatpush.bf16.msra.mxu0 %v1370
  %1529 = vmatpush.bf16.msra.mxu0 %v1369
  %1530 = vmatmul.bf16.gmra.mxu0 %v1520
  %v1531 = vpop.f32.mrf.mxu0
  %v1532 = vadd.f32 0.0, %v1531
  %v1533 = vpop.f32.mrf.mxu0
  %1534 = vdwg.mxu0
  %v1535 = vadd.f32 %v1514, %v1532
  %v1536 = vxor.u32 %v1535, 2147483648
  %v1537 = vmul.f32 %v1536, 1.442695
  %v1538 = vpow.pop %v1537
  %v1539 = vadd.f32 %v1538, 1.0
  %v1540 = vrcp.pop %v1539
  %v1541 = vmul.f32 %v1539, %v1540
  %v1542 = vsub.f32 1.0, %v1541
  %v1543 = vmul.f32 %v1540, %v1542
  %v1544 = vadd.f32 %v1540, %v1543
  %vm1545 = vweird.f32 %v1539
  %vm1546 = vweird.f32 %v1540
  %vm1547 = vmor %vm1545, %vm1546
  %v1548 = vsel %vm1547, %v1540, %v1544
  %v1549 = vand.u32 2147483647, %v1539
  %vm1550 = vcmp.eq.f32.partialorder %v1549, 8.507059e+37
  %v1551 = vand.u32 %v1539, 2147483648
  %v1552 = vor.u32 1.1754944e-38, %v1551
  %v1553 = vsel %vm1550, %v1552, %v1548
  %v1554 = vmul.f32 1.0, %v1553
  %v1555 = vtanh.pop %v1535
  %v1556 = vmul.f32 %v1554, %v1507
  %1558 = vrot.lane.b32.xlu0 %v1555, 64
  %v1559 = vpop.permute.xlu0 %1558
  %v1561 = vmul.f32 %v1554, %v1559
  %1563 = vrot.lane.b32.xlu0 %v1561, 32
  %v1564 = vpop.permute.xlu0 %1563
  %v1566 = vadd.f32 %v1556, %v1564
  %v1567 = vtanh.pop %v1566
  %1569 = vrot.lane.b32.xlu0 %v1567, 64
  %v1570 = vpop.permute.xlu0 %1569
  %v1572 = vmul.f32 %v1554, %v1570
  %v1573 = vld [vmem:[#allocation2 + $0x30] sm:$0xff]
  %v1574 = vpack.c.bf16 %v1572, %v1572
  %1576 = vrot.lane.b32.xlu0 %v1574, 32
  %v1577 = vpop.permute.xlu0 %1576
  %v1579 = vsel %vm198, %v1577, 0
  %1581 = vmatpush.bf16.msra.mxu0 0
  %1582 = vmatpush.bf16.msra.mxu0 0
  %1583 = vmatpush.bf16.msra.mxu0 0
  %1584 = vmatpush.bf16.msra.mxu0 0
  %1585 = vmatpush.bf16.msra.mxu0 0
  %1586 = vmatpush.bf16.msra.mxu0 0
  %1587 = vmatpush.bf16.msra.mxu0 %v1370
  %1588 = vmatpush.bf16.msra.mxu0 %v1369
  %1589 = vmatmul.bf16.gmra.mxu0 %v1579
  %v1590 = vpop.f32.mrf.mxu0
  %v1591 = vadd.f32 0.0, %v1590
  %v1592 = vpop.f32.mrf.mxu0
  %1593 = vdwg.mxu0
  %v1594 = vadd.f32 %v1573, %v1591
  %v1595 = vxor.u32 %v1594, 2147483648
  %v1596 = vmul.f32 %v1595, 1.442695
  %v1597 = vpow.pop %v1596
  %v1598 = vadd.f32 %v1597, 1.0
  %v1599 = vrcp.pop %v1598
  %v1600 = vmul.f32 %v1598, %v1599
  %v1601 = vsub.f32 1.0, %v1600
  %v1602 = vmul.f32 %v1599, %v1601
  %v1603 = vadd.f32 %v1599, %v1602
  %vm1604 = vweird.f32 %v1598
  %vm1605 = vweird.f32 %v1599
  %vm1606 = vmor %vm1604, %vm1605
  %v1607 = vsel %vm1606, %v1599, %v1603
  %v1608 = vand.u32 2147483647, %v1598
  %vm1609 = vcmp.eq.f32.partialorder %v1608, 8.507059e+37
  %v1610 = vand.u32 %v1598, 2147483648
  %v1611 = vor.u32 1.1754944e-38, %v1610
  %v1612 = vsel %vm1609, %v1611, %v1607
  %v1613 = vmul.f32 1.0, %v1612
  %v1614 = vtanh.pop %v1594
  %v1615 = vmul.f32 %v1613, %v1566
  %1617 = vrot.lane.b32.xlu0 %v1614, 64
  %v1618 = vpop.permute.xlu0 %1617
  %v1620 = vmul.f32 %v1613, %v1618
  %1622 = vrot.lane.b32.xlu0 %v1620, 32
  %v1623 = vpop.permute.xlu0 %1622
  %v1625 = vadd.f32 %v1615, %v1623
  %v1626 = vtanh.pop %v1625
  %1628 = vrot.lane.b32.xlu0 %v1626, 64
  %v1629 = vpop.permute.xlu0 %1628
  %v1631 = vmul.f32 %v1613, %v1629
  %v1632 = vld [vmem:[#allocation2 + $0x40] sm:$0xff]
  %v1633 = vpack.c.bf16 %v1631, %v1631
  %1635 = vrot.lane.b32.xlu0 %v1633, 32
  %v1636 = vpop.permute.xlu0 %1635
  %v1638 = vsel %vm198, %v1636, 0
  %1640 = vmatpush.bf16.msra.mxu0 0
  %1641 = vmatpush.bf16.msra.mxu0 0
  %1642 = vmatpush.bf16.msra.mxu0 0
  %1643 = vmatpush.bf16.msra.mxu0 0
  %1644 = vmatpush.bf16.msra.mxu0 0
  %1645 = vmatpush.bf16.msra.mxu0 0
  %1646 = vmatpush.bf16.msra.mxu0 %v1370
  %1647 = vmatpush.bf16.msra.mxu0 %v1369
  %1648 = vmatmul.bf16.gmra.mxu0 %v1638
  %v1649 = vpop.f32.mrf.mxu0
  %v1650 = vadd.f32 0.0, %v1649
  %v1651 = vpop.f32.mrf.mxu0
  %1652 = vdwg.mxu0
  %v1653 = vadd.f32 %v1632, %v1650
  %v1654 = vxor.u32 %v1653, 2147483648
  %v1655 = vmul.f32 %v1654, 1.442695
  %v1656 = vpow.pop %v1655
  %v1657 = vadd.f32 %v1656, 1.0
  %v1658 = vrcp.pop %v1657
  %v1659 = vmul.f32 %v1657, %v1658
  %v1660 = vsub.f32 1.0, %v1659
  %v1661 = vmul.f32 %v1658, %v1660
  %v1662 = vadd.f32 %v1658, %v1661
  %vm1663 = vweird.f32 %v1657
  %vm1664 = vweird.f32 %v1658
  %vm1665 = vmor %vm1663, %vm1664
  %v1666 = vsel %vm1665, %v1658, %v1662
  %v1667 = vand.u32 2147483647, %v1657
  %vm1668 = vcmp.eq.f32.partialorder %v1667, 8.507059e+37
  %v1669 = vand.u32 %v1657, 2147483648
  %v1670 = vor.u32 1.1754944e-38, %v1669
  %v1671 = vsel %vm1668, %v1670, %v1666
  %v1672 = vmul.f32 1.0, %v1671
  %v1673 = vtanh.pop %v1653
  %v1674 = vmul.f32 %v1672, %v1625
  %1676 = vrot.lane.b32.xlu0 %v1673, 64
  %v1677 = vpop.permute.xlu0 %1676
  %v1679 = vmul.f32 %v1672, %v1677
  %1681 = vrot.lane.b32.xlu0 %v1679, 32
  %v1682 = vpop.permute.xlu0 %1681
  %v1684 = vadd.f32 %v1674, %v1682
  %v1685 = vtanh.pop %v1684
  %1687 = vrot.lane.b32.xlu0 %v1685, 64
  %v1688 = vpop.permute.xlu0 %1687
  %v1690 = vmul.f32 %v1672, %v1688
  %v1691 = vld [vmem:[#allocation2 + $0x50] sm:$0xff]
  %v1692 = vpack.c.bf16 %v1690, %v1690
  %1694 = vrot.lane.b32.xlu0 %v1692, 32
  %v1695 = vpop.permute.xlu0 %1694
  %v1697 = vsel %vm198, %v1695, 0
  %1699 = vmatpush.bf16.msra.mxu0 0
  %1700 = vmatpush.bf16.msra.mxu0 0
  %1701 = vmatpush.bf16.msra.mxu0 0
  %1702 = vmatpush.bf16.msra.mxu0 0
  %1703 = vmatpush.bf16.msra.mxu0 0
  %1704 = vmatpush.bf16.msra.mxu0 0
  %1705 = vmatpush.bf16.msra.mxu0 %v1370
  %1706 = vmatpush.bf16.msra.mxu0 %v1369
  %1707 = vmatmul.bf16.gmra.mxu0 %v1697
  %v1708 = vpop.f32.mrf.mxu0
  %v1709 = vadd.f32 0.0, %v1708
  %v1710 = vpop.f32.mrf.mxu0
  %1711 = vdwg.mxu0
  %v1712 = vadd.f32 %v1691, %v1709
  %v1713 = vxor.u32 %v1712, 2147483648
  %v1714 = vmul.f32 %v1713, 1.442695
  %v1715 = vpow.pop %v1714
  %v1716 = vadd.f32 %v1715, 1.0
  %v1717 = vrcp.pop %v1716
  %v1718 = vmul.f32 %v1716, %v1717
  %v1719 = vsub.f32 1.0, %v1718
  %v1720 = vmul.f32 %v1717, %v1719
  %v1721 = vadd.f32 %v1717, %v1720
  %vm1722 = vweird.f32 %v1716
  %vm1723 = vweird.f32 %v1717
  %vm1724 = vmor %vm1722, %vm1723
  %v1725 = vsel %vm1724, %v1717, %v1721
  %v1726 = vand.u32 2147483647, %v1716
  %vm1727 = vcmp.eq.f32.partialorder %v1726, 8.507059e+37
  %v1728 = vand.u32 %v1716, 2147483648
  %v1729 = vor.u32 1.1754944e-38, %v1728
  %v1730 = vsel %vm1727, %v1729, %v1725
  %v1731 = vmul.f32 1.0, %v1730
  %v1732 = vtanh.pop %v1712
  %v1733 = vmul.f32 %v1731, %v1684
  %1735 = vrot.lane.b32.xlu0 %v1732, 64
  %v1736 = vpop.permute.xlu0 %1735
  %v1738 = vmul.f32 %v1731, %v1736
  %1740 = vrot.lane.b32.xlu0 %v1738, 32
  %v1741 = vpop.permute.xlu0 %1740
  %v1743 = vadd.f32 %v1733, %v1741
  %v1744 = vtanh.pop %v1743
  %1746 = vrot.lane.b32.xlu0 %v1744, 64
  %v1747 = vpop.permute.xlu0 %1746
  %v1749 = vmul.f32 %v1731, %v1747
  %v1750 = vld [vmem:[#allocation2 + $0x60] sm:$0xff]
  %v1751 = vpack.c.bf16 %v1749, %v1749
  %1753 = vrot.lane.b32.xlu0 %v1751, 32
  %v1754 = vpop.permute.xlu0 %1753
  %v1756 = vsel %vm198, %v1754, 0
  %1758 = vmatpush.bf16.msra.mxu0 0
  %1759 = vmatpush.bf16.msra.mxu0 0
  %1760 = vmatpush.bf16.msra.mxu0 0
  %1761 = vmatpush.bf16.msra.mxu0 0
  %1762 = vmatpush.bf16.msra.mxu0 0
  %1763 = vmatpush.bf16.msra.mxu0 0
  %1764 = vmatpush.bf16.msra.mxu0 %v1370
  %1765 = vmatpush.bf16.msra.mxu0 %v1369
  %1766 = vmatmul.bf16.gmra.mxu0 %v1756
  %v1767 = vpop.f32.mrf.mxu0
  %v1768 = vadd.f32 0.0, %v1767
  %v1769 = vpop.f32.mrf.mxu0
  %1770 = vdwg.mxu0
  %v1771 = vadd.f32 %v1750, %v1768
  %v1772 = vxor.u32 %v1771, 2147483648
  %v1773 = vmul.f32 %v1772, 1.442695
  %v1774 = vpow.pop %v1773
  %v1775 = vadd.f32 %v1774, 1.0
  %v1776 = vrcp.pop %v1775
  %v1777 = vmul.f32 %v1775, %v1776
  %v1778 = vsub.f32 1.0, %v1777
  %v1779 = vmul.f32 %v1776, %v1778
  %v1780 = vadd.f32 %v1776, %v1779
  %vm1781 = vweird.f32 %v1775
  %vm1782 = vweird.f32 %v1776
  %vm1783 = vmor %vm1781, %vm1782
  %v1784 = vsel %vm1783, %v1776, %v1780
  %v1785 = vand.u32 2147483647, %v1775
  %vm1786 = vcmp.eq.f32.partialorder %v1785, 8.507059e+37
  %v1787 = vand.u32 %v1775, 2147483648
  %v1788 = vor.u32 1.1754944e-38, %v1787
  %v1789 = vsel %vm1786, %v1788, %v1784
  %v1790 = vmul.f32 1.0, %v1789
  %v1791 = vtanh.pop %v1771
  %v1792 = vmul.f32 %v1790, %v1743
  %1794 = vrot.lane.b32.xlu0 %v1791, 64
  %v1795 = vpop.permute.xlu0 %1794
  %v1797 = vmul.f32 %v1790, %v1795
  %1799 = vrot.lane.b32.xlu0 %v1797, 32
  %v1800 = vpop.permute.xlu0 %1799
  %v1802 = vadd.f32 %v1792, %v1800
  %v1803 = vtanh.pop %v1802
  %1805 = vrot.lane.b32.xlu0 %v1803, 64
  %v1806 = vpop.permute.xlu0 %1805
  %v1808 = vmul.f32 %v1790, %v1806
  %v1809 = vld [vmem:[#allocation2 + $0x70] sm:$0xff]
  %v1810 = vpack.c.bf16 %v1808, %v1808
  %1812 = vrot.lane.b32.xlu0 %v1810, 32
  %v1813 = vpop.permute.xlu0 %1812
  %v1815 = vsel %vm198, %v1813, 0
  %1817 = vmatpush.bf16.msra.mxu0 0
  %1818 = vmatpush.bf16.msra.mxu0 0
  %1819 = vmatpush.bf16.msra.mxu0 0
  %1820 = vmatpush.bf16.msra.mxu0 0
  %1821 = vmatpush.bf16.msra.mxu0 0
  %1822 = vmatpush.bf16.msra.mxu0 0
  %1823 = vmatpush.bf16.msra.mxu0 %v1370
  %1824 = vmatpush.bf16.msra.mxu0 %v1369
  %1825 = vmatmul.bf16.gmra.mxu0 %v1815
  %v1826 = vpop.f32.mrf.mxu0
  %v1827 = vadd.f32 0.0, %v1826
  %v1828 = vpop.f32.mrf.mxu0
  %1829 = vdwg.mxu0
  %v1830 = vadd.f32 %v1809, %v1827
  %v1831 = vxor.u32 %v1830, 2147483648
  %v1832 = vmul.f32 %v1831, 1.442695
  %v1833 = vpow.pop %v1832
  %v1834 = vadd.f32 %v1833, 1.0
  %v1835 = vrcp.pop %v1834
  %v1836 = vmul.f32 %v1834, %v1835
  %v1837 = vsub.f32 1.0, %v1836
  %v1838 = vmul.f32 %v1835, %v1837
  %v1839 = vadd.f32 %v1835, %v1838
  %vm1840 = vweird.f32 %v1834
  %vm1841 = vweird.f32 %v1835
  %vm1842 = vmor %vm1840, %vm1841
  %v1843 = vsel %vm1842, %v1835, %v1839
  %v1844 = vand.u32 2147483647, %v1834
  %vm1845 = vcmp.eq.f32.partialorder %v1844, 8.507059e+37
  %v1846 = vand.u32 %v1834, 2147483648
  %v1847 = vor.u32 1.1754944e-38, %v1846
  %v1848 = vsel %vm1845, %v1847, %v1843
  %v1849 = vmul.f32 1.0, %v1848
  %v1850 = vtanh.pop %v1830
  %v1851 = vmul.f32 %v1849, %v1802
  %1853 = vrot.lane.b32.xlu0 %v1850, 64
  %v1854 = vpop.permute.xlu0 %1853
  %v1856 = vmul.f32 %v1849, %v1854
  %1858 = vrot.lane.b32.xlu0 %v1856, 32
  %v1859 = vpop.permute.xlu0 %1858
  %v1861 = vadd.f32 %v1851, %v1859
  %v1862 = vtanh.pop %v1861
  %1864 = vrot.lane.b32.xlu0 %v1862, 64
  %v1865 = vpop.permute.xlu0 %1864
  %v1867 = vmul.f32 %v1849, %v1865
  %v1868 = vld [vmem:[%s7] sm:$0xff]
  %v1869 = vld [vmem:[%s7 + $0x8] sm:$0xff]
  %v1870 = vld [vmem:[%s7 + $0x10] sm:$0xff]
  %v1871 = vld [vmem:[%s7 + $0x18] sm:$0xff]
  %v1872 = vld [vmem:[%s7 + $0x20] sm:$0xff]
  %v1873 = vld [vmem:[%s7 + $0x28] sm:$0xff]
  %v1874 = vld [vmem:[%s7 + $0x30] sm:$0xff]
  %v1875 = vld [vmem:[%s7 + $0x38] sm:$0xff]
  %1877 = vrot.lane.b32.xlu0 %v1402, 32
  %v1878 = vpop.permute.xlu0 %1877
  %v1879 = vsel %vm198, %v1878, 0
  %1881 = vmatpush.msra.mxu0 0.0
  %1882 = vmatpush.msra.mxu0 0.0
  %1883 = vmatpush.msra.mxu0 0.0
  %1884 = vmatpush.msra.mxu0 0.0
  %1885 = vmatpush.msra.mxu0 0.0
  %1886 = vmatpush.msra.mxu0 0.0
  %1887 = vmatpush.msra.mxu0 0.0
  %1888 = vmatpush.msra.mxu0 0.0
  %1889 = vmatpush.msra.mxu0 0.0
  %1890 = vmatpush.msra.mxu0 0.0
  %1891 = vmatpush.msra.mxu0 0.0
  %1892 = vmatpush.msra.mxu0 0.0
  %1893 = vmatpush.msra.mxu0 %v1875
  %1894 = vmatpush.msra.mxu0 %v1874
  %1895 = vmatpush.msra.mxu0 %v1873
  %1896 = vmatpush.msra.mxu0 %v1872
  %1897 = vmatmul.f32.gmra.mxu0 %v1879
  %v1898 = vpop.f32.mrf.mxu0
  %v1899 = vadd.f32 0.0, %v1898
  %1900 = vdwg.mxu0
  %1902 = vrot.lane.b32.xlu0 %v1867, 32
  %v1903 = vpop.permute.xlu0 %1902
  %v1904 = vsel %vm198, %v1903, 0
  %1906 = vmatpush.msra.mxu0 0.0
  %1907 = vmatpush.msra.mxu0 0.0
  %1908 = vmatpush.msra.mxu0 0.0
  %1909 = vmatpush.msra.mxu0 0.0
  %1910 = vmatpush.msra.mxu0 0.0
  %1911 = vmatpush.msra.mxu0 0.0
  %1912 = vmatpush.msra.mxu0 0.0
  %1913 = vmatpush.msra.mxu0 0.0
  %1914 = vmatpush.msra.mxu0 0.0
  %1915 = vmatpush.msra.mxu0 0.0
  %1916 = vmatpush.msra.mxu0 0.0
  %1917 = vmatpush.msra.mxu0 0.0
  %1918 = vmatpush.msra.mxu0 %v1871
  %1919 = vmatpush.msra.mxu0 %v1870
  %1920 = vmatpush.msra.mxu0 %v1869
  %1921 = vmatpush.msra.mxu0 %v1868
  %1922 = vmatmul.f32.gmra.mxu0 %v1904
  %v1923 = vpop.f32.mrf.mxu0
  %v1924 = vadd.f32 %v1899, %v1923
  %1925 = vdwg.mxu0
  %v1926 = vld [vmem:[%s8] sm:$0x1]
  %v1928 = vperm.slane %v1926, 0
  %v1930 = vadd.f32 %v1924, %v1928
  %vm1931 = vcmask 72704
  %1932 = vst.msk [vmem:[%s9] sm:$0xff] %vm1931, %v1930
  // Predicated region
  $region38: #{rnn_forward.1} parent=0 // pred_check
    _
  $region39: #{rnn_forward.1} parent=0 // pred_check_branch
    %1934 = sbr.rel (0) target = $region41
  $region40: #{rnn_forward.1} parent=0 // pred_region
    _
  $region41: #{rnn_forward.1} parent=0 // pred_fallthru
    _
  // Predicated region
  $region42: #{rnn_forward.1} parent=0 // pred_check
    _
  $region43: #{rnn_forward.1} parent=0 // pred_check_branch
    %1936 = sbr.rel (0) target = $region45
  $region44: #{rnn_forward.1} parent=0 // pred_region
    _
  $region45: #{rnn_forward.1} parent=0 // pred_fallthru
    _

</llo_original>
